<compile_context>
chip_gen: v6e
topology: v6e:2x2x1
jax: 0.10.0
libtpu: 0.0.40
codegen_flags: <defaults>
</compile_context>

<pallas_src>
import functools

import jax
import jax.numpy as jnp
from jax.experimental import pallas as pl
from jax.experimental.pallas import tpu as pltpu

EPS = 1e-8                 # EQ epsilon from the PyTorch module
BN_EPS = 1e-5              # nn.BatchNorm1d default eps
SOFTPLUS_THRESHOLD = 20.0  # F.softplus default threshold
GUARD = 128                # lane-aligned guard region before / after the slabs
LANE = 128

_VMEM = pl.BlockSpec(memory_space=pltpu.MemorySpace.VMEM)


def _round_up(x, m):
    return (x + m - 1) // m * m


# ---------------------------------------------------------------------------
# Fused encoder kernel
# ---------------------------------------------------------------------------
def _encoder_kernel(x_ref, gb_ref, m_ref, mt_ref, int_ref, *rest,
                    dims, ksize, pad, batch, length, slab_w,
                    all_eq, final_eq):
    """Whole Encoder in one kernel.

    x_ref  : (Cin0, GUARD + B*slab_w + GUARD)  host-padded, guarded input slab
    gb_ref : (Cmax, 2*n_layers)                packed [gamma_i | beta_i] cols
    m_ref  : (NL, B)    slab-indicator matrix (1.0 on valid (b, t) lanes)
    mt_ref : (B, NL)    its transpose
    int_ref: (1, NL)    interior mask (union of all slabs)
    rest   : n_layers weight refs (K*Cout_i, Cin_i), then o_ref, then a_ref
    o_ref  : (C_last, NL)                      final activation, lane-dense
    a_ref  : (Cmax, GUARD + NL + GUARD)        guarded inter-layer scratch
    """
    n_layers = len(dims)
    w_refs = rest[:n_layers]
    o_ref = rest[n_layers]
    a_ref = rest[n_layers + 1]

    n_lanes = batch * slab_w
    c_max = a_ref.shape[0]
    rear = a_ref.shape[1] - GUARD - n_lanes

    # One-time zero of the scratch guard columns (lane-aligned stores).  The
    # slab region itself is always overwritten with masked activations, and
    # the guards are never written again, so they stay zero for every layer.
    a_ref[:, 0:GUARD] = jnp.zeros((c_max, GUARD), jnp.float32)
    a_ref[:, GUARD + n_lanes:GUARD + n_lanes + rear] = (
        jnp.zeros((c_max, rear), jnp.float32))

    interior = int_ref[...]            # (1, NL)
    m_mat = m_ref[...]                 # (NL, B)
    mt_mat = mt_ref[...]               # (B, NL)
    gb = gb_ref[...]

    inv_bn = 1.0 / float(batch * length)
    inv_len = 1.0 / float(length)

    def slab_sums(t):                  # (C, NL) -> (C, B) on the MXU
        return jnp.dot(t, m_mat, preferred_element_type=jnp.float32)

    def mean_eq(t):
        # t has zero pad lanes; per-(batch, channel) mean over length, then
        # x / (mean + EPS) with the divide on the EUP via pl.reciprocal.
        mu = slab_sums(t) * inv_len                                   # (C, B)
        mu_full = jnp.dot(mu, mt_mat, preferred_element_type=jnp.float32)
        return t * pl.reciprocal(mu_full + EPS)

    out = None
    for i, (cin, cout) in enumerate(dims):
        src = x_ref if i == 0 else a_ref

        # ---- Conv1d: K accumulated matmuls; tap shift = static window read
        # of the guarded ref (reads at lane offsets GUARD-pad .. GUARD+pad).
        y = None
        for k in range(ksize):
            wk = w_refs[i][k * cout:(k + 1) * cout, :]                # (co,ci)
            win = src[0:cin, GUARD - pad + k: GUARD - pad + k + n_lanes]
            t = jnp.dot(wk, win, preferred_element_type=jnp.float32)  # (co,NL)
            y = t if y is None else y + t
        # (conv bias omitted: exactly cancelled by the BN mean subtraction)

        # Zero the slab-pad lanes before any statistics.
        y = y * interior

        # ---- BatchNorm1d, training (batch) stats, two-pass variance --------
        mean = jnp.sum(slab_sums(y), axis=1, keepdims=True) * inv_bn  # (co,1)
        d = (y - mean) * interior
        var = jnp.sum(slab_sums(d * d), axis=1, keepdims=True) * inv_bn
        gamma = gb[0:cout, 2 * i:2 * i + 1]                           # (co,1)
        beta = gb[0:cout, 2 * i + 1:2 * i + 2]                        # (co,1)
        scale = gamma * jax.lax.rsqrt(var + BN_EPS)
        y = d * scale + beta

        # ---- softplus (PyTorch threshold semantics) -------------------------
        y = jnp.where(y > SOFTPLUS_THRESHOLD, y, jnp.log1p(jnp.exp(y)))

        # Re-zero pad lanes (softplus(beta) > 0) so they act as the next
        # layer's zero padding and don't pollute the EQ means.
        y = y * interior

        # ---- optional per-layer EQ ------------------------------------------
        if all_eq:
            y = mean_eq(y)

        if i + 1 < n_layers:
            # Lane-aligned, full-width writeback (offset GUARD = 128).
            a_ref[0:cout, GUARD:GUARD + n_lanes] = y
        else:
            out = y

    # ---- optional final EQ (applies on top of all_EQ, as in PyTorch) --------
    if final_eq:
        out = mean_eq(out)

    o_ref[...] = out


# ---------------------------------------------------------------------------
# Host-side wrappers
# ---------------------------------------------------------------------------
def encoder_forward(packed, x, config):
    """Runs the whole encoder as a single pallas_call.  x is NCL (B, C, L)."""
    w_mats, gb, dims = packed["w_mats"], packed["gb"], packed["dims"]
    ksize = config["time"]["kernel_size"]
    stride = config["time"]["stride"]
    pad = config["time"]["padding"]
    assert stride == 1 and 2 * pad == ksize - 1, (
        "fused encoder kernel supports the 'same' conv config "
        "(stride=1, 2*padding == kernel_size-1)")
    assert pad <= GUARD

    B, c0, L = x.shape
    assert c0 == dims[0][0], (c0, dims)
    slab_w = _round_up(L + pad, LANE)          # lane-dense per-batch slab
    n_lanes = B * slab_w
    c_last = dims[-1][1]
    c_max = max(co for _, co in dims)

    # ---- host-side layout plumbing (free relative to the kernel) -----------
    # x (B, C, L) -> guarded flat slab (C, GUARD + B*slab_w + GUARD), zeros in
    # all pad / guard lanes.
    xs = jnp.transpose(x.astype(jnp.float32), (1, 0, 2))          # (C, B, L)
    xs = jnp.pad(xs, ((0, 0), (0, 0), (0, slab_w - L)))           # (C, B, W)
    xs = xs.reshape(c0, n_lanes)
    xs = jnp.pad(xs, ((0, 0), (GUARD, GUARD)))                    # guarded

    lane = jnp.arange(n_lanes)
    interior = (lane % slab_w < L).astype(jnp.float32)            # (NL,)
    m_mat = jax.nn.one_hot(lane // slab_w, B,
                           dtype=jnp.float32) * interior[:, None]  # (NL, B)
    mt_mat = m_mat.T                                               # (B, NL)
    interior_row = interior.reshape(1, n_lanes)

    kernel = functools.partial(
        _encoder_kernel,
        dims=dims, ksize=ksize, pad=pad, batch=B, length=L, slab_w=slab_w,
        all_eq=bool(config["all_EQ"]), final_eq=bool(config["EQ"]))

    out_flat = pl.pallas_call(
        kernel,
        out_shape=jax.ShapeDtypeStruct((c_last, n_lanes), jnp.float32),
        in_specs=[_VMEM] * (5 + len(dims)),
        out_specs=_VMEM,
        scratch_shapes=[
            pltpu.VMEM((c_max, GUARD + n_lanes + GUARD), jnp.float32)],
        compiler_params=pltpu.CompilerParams(
            # Explicit VMEM budget (full residency, no pipelining): safe on
            # v5e/v6e (128 MiB) and within the v7x 64 MiB ceiling.
            vmem_limit_bytes=16 * 1024 * 1024),
    )(xs, gb, m_mat, mt_mat, interior_row, *w_mats)

    # Strip slab padding and restore the PyTorch NCL layout (tiny XLA
    # epilogue outside the kernel).
    out = out_flat.reshape(c_last, B, slab_w)[:, :, :L]
    return jnp.transpose(out, (1, 0, 2))


def build_encoder_params(config, customize, inter_dims, key):
    """Deterministic parameter init mirroring the PyTorch __init__ shapes.

    No conv bias is created: with training-mode BatchNorm the per-channel bias
    is exactly cancelled by the batch-mean subtraction.
    """
    assert config["conv_dim"] == 1
    in_ch0 = int(config["filter_length"] / 2) + 1
    k = config["time"]["kernel_size"]

    layer_dims = []
    if customize:
        for i in range(len(inter_dims)):
            cin = in_ch0 if i == 0 else inter_dims[i - 1]
            layer_dims.append((cin, inter_dims[i]))
    else:
        dim = config["dim"]
        for i in range(config["num_layers"]):
            cin = in_ch0 if i == 0 else dim // 2 ** (i - 1)
            cout = dim if i == 0 else dim // 2 ** i
            layer_dims.append((cin, cout))

    params = []
    for (cin, cout) in layer_dims:
        key, kw = jax.random.split(key)
        params.append(dict(
            w=0.1 * jax.random.normal(kw, (cout, cin, k), jnp.float32),
            gamma=jnp.ones((cout,), jnp.float32),   # BN weight init
            beta=jnp.zeros((cout,), jnp.float32),   # BN bias init
        ))
    return params


def pack_encoder_params(params, kernel_size):
    """Pack params into the layouts the fused kernel consumes."""
    dims = tuple((int(p["w"].shape[1]), int(p["w"].shape[0])) for p in params)
    # (Cout, Cin, K) -> (K*Cout, Cin): tap k's (Cout, Cin) matrix is the k-th
    # row block, so the kernel's per-tap slices are sublane-aligned.
    w_mats = tuple(
        jnp.transpose(p["w"], (2, 0, 1)).reshape(
            kernel_size * p["w"].shape[0], p["w"].shape[1])
        for p in params)
    c_max = max(max(ci, co) for ci, co in dims)
    gb = jnp.zeros((c_max, 2 * len(params)), jnp.float32)
    for i, p in enumerate(params):
        cout = p["w"].shape[0]
        gb = gb.at[:cout, 2 * i].set(p["gamma"])
        gb = gb.at[:cout, 2 * i + 1].set(p["beta"])
    return dict(w_mats=w_mats, gb=gb, dims=dims)


# ---------------------------------------------------------------------------
# Pure-JAX reference (for a loose numerical sanity check)
# ---------------------------------------------------------------------------
def encoder_reference(params, x, config):
    pad = config["time"]["padding"]
    ksize = config["time"]["kernel_size"]
    h = x
    for p in params:
        w = p["w"]                                           # (cout, cin, K)
        L = h.shape[2]
        hp = jnp.pad(h, ((0, 0), (0, 0), (pad, pad)))
        cols = jnp.stack([hp[:, :, k:k + L] for k in range(ksize)], axis=-1)
        y = jnp.einsum("ock,bctk->bot", w, cols)
        mean = jnp.mean(y, axis=(0, 2), keepdims=True)
        var = jnp.mean((y - mean) ** 2, axis=(0, 2), keepdims=True)
        y = (y - mean) / jnp.sqrt(var + BN_EPS)
        y = y * p["gamma"][None, :, None] + p["beta"][None, :, None]
        y = jnp.where(y > SOFTPLUS_THRESHOLD, y, jnp.log1p(jnp.exp(y)))
        if config["all_EQ"]:
            y = y / (jnp.mean(y, axis=2, keepdims=True) + EPS)
        h = y
    if config["EQ"]:
        h = h / (jnp.mean(h, axis=2, keepdims=True) + EPS)
    return h


# ---------------------------------------------------------------------------
if __name__ == "__main__":
    config = dict(
        dim=32,
        filter_length=14,          # -> input channels = 14/2 + 1 = 8
        conv_dim=1,
        num_layers=3,              # channels: 8 -> 32 -> 16 -> 8
        time=dict(kernel_size=3, stride=1, padding=1),
        EQ=True,
        all_EQ=True,
    )
    customize = False
    inter_dims = []

    key = jax.random.PRNGKey(0)
    key, kparams, kx = jax.random.split(key, 3)

    params = build_encoder_params(config, customize, inter_dims, kparams)
    packed = pack_encoder_params(params, config["time"]["kernel_size"])

    # input: (batch=2, channels=filter_length/2+1=8, length=16), NCL layout
    x = jax.random.normal(kx, (2, 8, 16), jnp.float32)

    out = encoder_forward(packed, x, config)
    out = jax.block_until_ready(out)

    assert out.shape == (2, 8, 16), out.shape
    assert bool(jnp.all(jnp.isfinite(out)))

    ref = encoder_reference(params, x, config)
    err = float(jnp.max(jnp.abs(out - ref)))
    assert err < 5e-2, f"max abs error vs reference: {err}"

    print("KERNEL_OK")
</pallas_src>

<mosaic_0001>
module attributes {stable_mosaic.version = 11 : i64} {
  func.func @_encoder_kernel(%arg0: memref<8x512xf32, #tpu.memory_space<vmem>>, %arg1: memref<32x6xf32, #tpu.memory_space<vmem>>, %arg2: memref<256x2xf32, #tpu.memory_space<vmem>>, %arg3: memref<2x256xf32, #tpu.memory_space<vmem>>, %arg4: memref<1x256xf32, #tpu.memory_space<vmem>>, %arg5: memref<96x8xf32, #tpu.memory_space<vmem>>, %arg6: memref<48x32xf32, #tpu.memory_space<vmem>>, %arg7: memref<24x16xf32, #tpu.memory_space<vmem>>, %arg8: memref<8x256xf32, #tpu.memory_space<vmem>>, %arg9: memref<32x512xf32, #tpu.memory_space<vmem>>) attributes {dimension_semantics = [], scalar_prefetch = 0 : i64, scratch_operands = 1 : i64, tpu.core_type = #tpu.core_type<tc>} {
    %cst = arith.constant 0.000000e+00 : f32
    %0 = vector.broadcast %cst : f32 to vector<32x128xf32>
    %c0 = arith.constant 0 : index
    %c0_0 = arith.constant 0 : index
    %1 = vector.load %arg9[%c0, %c0_0] : memref<32x512xf32, #tpu.memory_space<vmem>>, vector<32x128xf32>
    tpu.vector_store %arg9[%c0, %c0_0], %0 {strides = array<i32>} : memref<32x512xf32, #tpu.memory_space<vmem>>, vector<32x128xf32>,
    %cst_1 = arith.constant 0.000000e+00 : f32
    %2 = vector.broadcast %cst_1 : f32 to vector<32x128xf32>
    %c0_2 = arith.constant 0 : index
    %c384 = arith.constant 384 : index
    %3 = vector.load %arg9[%c0_2, %c384] : memref<32x512xf32, #tpu.memory_space<vmem>>, vector<32x128xf32>
    tpu.vector_store %arg9[%c0_2, %c384], %2 {strides = array<i32>} : memref<32x512xf32, #tpu.memory_space<vmem>>, vector<32x128xf32>,
    %c0_3 = arith.constant 0 : index
    %c0_4 = arith.constant 0 : index
    %4 = vector.load %arg4[%c0_3, %c0_4] : memref<1x256xf32, #tpu.memory_space<vmem>>, vector<1x256xf32>
    %c0_5 = arith.constant 0 : index
    %c0_6 = arith.constant 0 : index
    %5 = vector.load %arg2[%c0_5, %c0_6] : memref<256x2xf32, #tpu.memory_space<vmem>>, vector<256x2xf32>
    %c0_7 = arith.constant 0 : index
    %c0_8 = arith.constant 0 : index
    %6 = vector.load %arg3[%c0_7, %c0_8] : memref<2x256xf32, #tpu.memory_space<vmem>>, vector<2x256xf32>
    %c0_9 = arith.constant 0 : index
    %c0_10 = arith.constant 0 : index
    %7 = vector.load %arg1[%c0_9, %c0_10] : memref<32x6xf32, #tpu.memory_space<vmem>>, vector<32x6xf32>
    %c0_11 = arith.constant 0 : index
    %c0_12 = arith.constant 0 : index
    %8 = vector.load %arg5[%c0_11, %c0_12] : memref<96x8xf32, #tpu.memory_space<vmem>>, vector<32x8xf32>
    %c0_13 = arith.constant 0 : index
    %c127 = arith.constant 127 : index
    %9 = vector.load %arg0[%c0_13, %c127] : memref<8x512xf32, #tpu.memory_space<vmem>>, vector<8x256xf32>
    %cst_14 = arith.constant dense<0.000000e+00> : vector<32x256xf32>
    %10 = tpu.matmul %8, %9, %cst_14 {dimension_numbers = #tpu.dot_dimension_numbers<[1], [0], [0], [1], [0, 0, 1, 1], [], []>} : vector<32x8xf32>, vector<8x256xf32>, vector<32x256xf32> -> vector<32x256xf32>
    %c32 = arith.constant 32 : index
    %c0_15 = arith.constant 0 : index
    %11 = vector.load %arg5[%c32, %c0_15] : memref<96x8xf32, #tpu.memory_space<vmem>>, vector<32x8xf32>
    %c0_16 = arith.constant 0 : index
    %c128 = arith.constant 128 : index
    %12 = vector.load %arg0[%c0_16, %c128] : memref<8x512xf32, #tpu.memory_space<vmem>>, vector<8x256xf32>
    %cst_17 = arith.constant dense<0.000000e+00> : vector<32x256xf32>
    %13 = tpu.matmul %11, %12, %cst_17 {dimension_numbers = #tpu.dot_dimension_numbers<[1], [0], [0], [1], [0, 0, 1, 1], [], []>} : vector<32x8xf32>, vector<8x256xf32>, vector<32x256xf32> -> vector<32x256xf32>
    %14 = arith.addf %10, %13 : vector<32x256xf32>
    %c64 = arith.constant 64 : index
    %c0_18 = arith.constant 0 : index
    %15 = vector.load %arg5[%c64, %c0_18] : memref<96x8xf32, #tpu.memory_space<vmem>>, vector<32x8xf32>
    %c0_19 = arith.constant 0 : index
    %c129 = arith.constant 129 : index
    %16 = vector.load %arg0[%c0_19, %c129] : memref<8x512xf32, #tpu.memory_space<vmem>>, vector<8x256xf32>
    %cst_20 = arith.constant dense<0.000000e+00> : vector<32x256xf32>
    %17 = tpu.matmul %15, %16, %cst_20 {dimension_numbers = #tpu.dot_dimension_numbers<[1], [0], [0], [1], [0, 0, 1, 1], [], []>} : vector<32x8xf32>, vector<8x256xf32>, vector<32x256xf32> -> vector<32x256xf32>
    %18 = arith.addf %14, %17 : vector<32x256xf32>
    %19 = vector.broadcast %4 : vector<1x256xf32> to vector<32x256xf32>
    %20 = arith.mulf %18, %19 : vector<32x256xf32>
    %cst_21 = arith.constant dense<0.000000e+00> : vector<32x2xf32>
    %21 = tpu.matmul %20, %5, %cst_21 {dimension_numbers = #tpu.dot_dimension_numbers<[1], [0], [0], [1], [0, 0, 1, 1], [], []>} : vector<32x256xf32>, vector<256x2xf32>, vector<32x2xf32> -> vector<32x2xf32>
    %cst_22 = arith.constant dense<0.000000e+00> : vector<32xf32>
    %22 = vector.multi_reduction <add>, %21, %cst_22 [1] : vector<32x2xf32> to vector<32xf32>
    %23 = vector.shape_cast %22 : vector<32xf32> to vector<32x1xf32>
    %cst_23 = arith.constant 3.125000e-02 : f32
    %24 = vector.broadcast %cst_23 : f32 to vector<32x1xf32>
    %25 = arith.mulf %23, %24 : vector<32x1xf32>
    %26 = vector.broadcast %25 : vector<32x1xf32> to vector<32x256xf32>
    %27 = arith.subf %20, %26 : vector<32x256xf32>
    %28 = vector.broadcast %4 : vector<1x256xf32> to vector<32x256xf32>
    %29 = arith.mulf %27, %28 : vector<32x256xf32>
    %30 = arith.mulf %29, %29 : vector<32x256xf32>
    %cst_24 = arith.constant dense<0.000000e+00> : vector<32x2xf32>
    %31 = tpu.matmul %30, %5, %cst_24 {dimension_numbers = #tpu.dot_dimension_numbers<[1], [0], [0], [1], [0, 0, 1, 1], [], []>} : vector<32x256xf32>, vector<256x2xf32>, vector<32x2xf32> -> vector<32x2xf32>
    %cst_25 = arith.constant dense<0.000000e+00> : vector<32xf32>
    %32 = vector.multi_reduction <add>, %31, %cst_25 [1] : vector<32x2xf32> to vector<32xf32>
    %33 = vector.shape_cast %32 : vector<32xf32> to vector<32x1xf32>
    %cst_26 = arith.constant 3.125000e-02 : f32
    %34 = vector.broadcast %cst_26 : f32 to vector<32x1xf32>
    %35 = arith.mulf %33, %34 : vector<32x1xf32>
    %36 = vector.extract_strided_slice %7 {offsets = [0, 0], sizes = [32, 1], strides = [1, 1]} : vector<32x6xf32> to vector<32x1xf32>
    %37 = vector.extract_strided_slice %7 {offsets = [0, 1], sizes = [32, 1], strides = [1, 1]} : vector<32x6xf32> to vector<32x1xf32>
    %cst_27 = arith.constant 9.99999974E-6 : f32
    %38 = vector.broadcast %cst_27 : f32 to vector<32x1xf32>
    %39 = arith.addf %35, %38 : vector<32x1xf32>
    %40 = math.rsqrt %39 : vector<32x1xf32>
    %41 = arith.mulf %36, %40 : vector<32x1xf32>
    %42 = vector.broadcast %41 : vector<32x1xf32> to vector<32x256xf32>
    %43 = arith.mulf %29, %42 : vector<32x256xf32>
    %44 = vector.broadcast %37 : vector<32x1xf32> to vector<32x256xf32>
    %45 = arith.addf %43, %44 : vector<32x256xf32>
    %cst_28 = arith.constant 2.000000e+01 : f32
    %46 = vector.broadcast %cst_28 : f32 to vector<32x256xf32>
    %47 = arith.cmpf ogt, %45, %46 : vector<32x256xf32>
    %48 = math.exp %45 : vector<32x256xf32>
    %49 = math.log1p %48 : vector<32x256xf32>
    %50 = arith.select %47, %45, %49 : vector<32x256xi1>, vector<32x256xf32>
    %51 = vector.broadcast %4 : vector<1x256xf32> to vector<32x256xf32>
    %52 = arith.mulf %50, %51 : vector<32x256xf32>
    %cst_29 = arith.constant dense<0.000000e+00> : vector<32x2xf32>
    %53 = tpu.matmul %52, %5, %cst_29 {dimension_numbers = #tpu.dot_dimension_numbers<[1], [0], [0], [1], [0, 0, 1, 1], [], []>} : vector<32x256xf32>, vector<256x2xf32>, vector<32x2xf32> -> vector<32x2xf32>
    %cst_30 = arith.constant 6.250000e-02 : f32
    %54 = vector.broadcast %cst_30 : f32 to vector<32x2xf32>
    %55 = arith.mulf %53, %54 : vector<32x2xf32>
    %cst_31 = arith.constant dense<0.000000e+00> : vector<32x256xf32>
    %56 = tpu.matmul %55, %6, %cst_31 {dimension_numbers = #tpu.dot_dimension_numbers<[1], [0], [0], [1], [0, 0, 1, 1], [], []>} : vector<32x2xf32>, vector<2x256xf32>, vector<32x256xf32> -> vector<32x256xf32>
    %cst_32 = arith.constant 9.99999993E-9 : f32
    %57 = vector.broadcast %cst_32 : f32 to vector<32x256xf32>
    %58 = arith.addf %56, %57 : vector<32x256xf32>
    %59 = tpu.reciprocal %58 : vector<32x256xf32> -> vector<32x256xf32>
    %60 = arith.mulf %52, %59 : vector<32x256xf32>
    %c0_33 = arith.constant 0 : index
    %c128_34 = arith.constant 128 : index
    %61 = vector.load %arg9[%c0_33, %c128_34] : memref<32x512xf32, #tpu.memory_space<vmem>>, vector<32x256xf32>
    tpu.vector_store %arg9[%c0_33, %c128_34], %60 {strides = array<i32>} : memref<32x512xf32, #tpu.memory_space<vmem>>, vector<32x256xf32>,
    %c0_35 = arith.constant 0 : index
    %c0_36 = arith.constant 0 : index
    %62 = vector.load %arg6[%c0_35, %c0_36] : memref<48x32xf32, #tpu.memory_space<vmem>>, vector<16x32xf32>
    %c0_37 = arith.constant 0 : index
    %c127_38 = arith.constant 127 : index
    %63 = vector.load %arg9[%c0_37, %c127_38] : memref<32x512xf32, #tpu.memory_space<vmem>>, vector<32x256xf32>
    %cst_39 = arith.constant dense<0.000000e+00> : vector<16x256xf32>
    %64 = tpu.matmul %62, %63, %cst_39 {dimension_numbers = #tpu.dot_dimension_numbers<[1], [0], [0], [1], [0, 0, 1, 1], [], []>} : vector<16x32xf32>, vector<32x256xf32>, vector<16x256xf32> -> vector<16x256xf32>
    %c16 = arith.constant 16 : index
    %c0_40 = arith.constant 0 : index
    %65 = vector.load %arg6[%c16, %c0_40] : memref<48x32xf32, #tpu.memory_space<vmem>>, vector<16x32xf32>
    %c0_41 = arith.constant 0 : index
    %c128_42 = arith.constant 128 : index
    %66 = vector.load %arg9[%c0_41, %c128_42] : memref<32x512xf32, #tpu.memory_space<vmem>>, vector<32x256xf32>
    %cst_43 = arith.constant dense<0.000000e+00> : vector<16x256xf32>
    %67 = tpu.matmul %65, %66, %cst_43 {dimension_numbers = #tpu.dot_dimension_numbers<[1], [0], [0], [1], [0, 0, 1, 1], [], []>} : vector<16x32xf32>, vector<32x256xf32>, vector<16x256xf32> -> vector<16x256xf32>
    %68 = arith.addf %64, %67 : vector<16x256xf32>
    %c32_44 = arith.constant 32 : index
    %c0_45 = arith.constant 0 : index
    %69 = vector.load %arg6[%c32_44, %c0_45] : memref<48x32xf32, #tpu.memory_space<vmem>>, vector<16x32xf32>
    %c0_46 = arith.constant 0 : index
    %c129_47 = arith.constant 129 : index
    %70 = vector.load %arg9[%c0_46, %c129_47] : memref<32x512xf32, #tpu.memory_space<vmem>>, vector<32x256xf32>
    %cst_48 = arith.constant dense<0.000000e+00> : vector<16x256xf32>
    %71 = tpu.matmul %69, %70, %cst_48 {dimension_numbers = #tpu.dot_dimension_numbers<[1], [0], [0], [1], [0, 0, 1, 1], [], []>} : vector<16x32xf32>, vector<32x256xf32>, vector<16x256xf32> -> vector<16x256xf32>
    %72 = arith.addf %68, %71 : vector<16x256xf32>
    %73 = vector.broadcast %4 : vector<1x256xf32> to vector<16x256xf32>
    %74 = arith.mulf %72, %73 : vector<16x256xf32>
    %cst_49 = arith.constant dense<0.000000e+00> : vector<16x2xf32>
    %75 = tpu.matmul %74, %5, %cst_49 {dimension_numbers = #tpu.dot_dimension_numbers<[1], [0], [0], [1], [0, 0, 1, 1], [], []>} : vector<16x256xf32>, vector<256x2xf32>, vector<16x2xf32> -> vector<16x2xf32>
    %cst_50 = arith.constant dense<0.000000e+00> : vector<16xf32>
    %76 = vector.multi_reduction <add>, %75, %cst_50 [1] : vector<16x2xf32> to vector<16xf32>
    %77 = vector.shape_cast %76 : vector<16xf32> to vector<16x1xf32>
    %cst_51 = arith.constant 3.125000e-02 : f32
    %78 = vector.broadcast %cst_51 : f32 to vector<16x1xf32>
    %79 = arith.mulf %77, %78 : vector<16x1xf32>
    %80 = vector.broadcast %79 : vector<16x1xf32> to vector<16x256xf32>
    %81 = arith.subf %74, %80 : vector<16x256xf32>
    %82 = vector.broadcast %4 : vector<1x256xf32> to vector<16x256xf32>
    %83 = arith.mulf %81, %82 : vector<16x256xf32>
    %84 = arith.mulf %83, %83 : vector<16x256xf32>
    %cst_52 = arith.constant dense<0.000000e+00> : vector<16x2xf32>
    %85 = tpu.matmul %84, %5, %cst_52 {dimension_numbers = #tpu.dot_dimension_numbers<[1], [0], [0], [1], [0, 0, 1, 1], [], []>} : vector<16x256xf32>, vector<256x2xf32>, vector<16x2xf32> -> vector<16x2xf32>
    %cst_53 = arith.constant dense<0.000000e+00> : vector<16xf32>
    %86 = vector.multi_reduction <add>, %85, %cst_53 [1] : vector<16x2xf32> to vector<16xf32>
    %87 = vector.shape_cast %86 : vector<16xf32> to vector<16x1xf32>
    %cst_54 = arith.constant 3.125000e-02 : f32
    %88 = vector.broadcast %cst_54 : f32 to vector<16x1xf32>
    %89 = arith.mulf %87, %88 : vector<16x1xf32>
    %90 = vector.extract_strided_slice %7 {offsets = [0, 2], sizes = [16, 1], strides = [1, 1]} : vector<32x6xf32> to vector<16x1xf32>
    %91 = vector.extract_strided_slice %7 {offsets = [0, 3], sizes = [16, 1], strides = [1, 1]} : vector<32x6xf32> to vector<16x1xf32>
    %cst_55 = arith.constant 9.99999974E-6 : f32
    %92 = vector.broadcast %cst_55 : f32 to vector<16x1xf32>
    %93 = arith.addf %89, %92 : vector<16x1xf32>
    %94 = math.rsqrt %93 : vector<16x1xf32>
    %95 = arith.mulf %90, %94 : vector<16x1xf32>
    %96 = vector.broadcast %95 : vector<16x1xf32> to vector<16x256xf32>
    %97 = arith.mulf %83, %96 : vector<16x256xf32>
    %98 = vector.broadcast %91 : vector<16x1xf32> to vector<16x256xf32>
    %99 = arith.addf %97, %98 : vector<16x256xf32>
    %cst_56 = arith.constant 2.000000e+01 : f32
    %100 = vector.broadcast %cst_56 : f32 to vector<16x256xf32>
    %101 = arith.cmpf ogt, %99, %100 : vector<16x256xf32>
    %102 = math.exp %99 : vector<16x256xf32>
    %103 = math.log1p %102 : vector<16x256xf32>
    %104 = arith.select %101, %99, %103 : vector<16x256xi1>, vector<16x256xf32>
    %105 = vector.broadcast %4 : vector<1x256xf32> to vector<16x256xf32>
    %106 = arith.mulf %104, %105 : vector<16x256xf32>
    %cst_57 = arith.constant dense<0.000000e+00> : vector<16x2xf32>
    %107 = tpu.matmul %106, %5, %cst_57 {dimension_numbers = #tpu.dot_dimension_numbers<[1], [0], [0], [1], [0, 0, 1, 1], [], []>} : vector<16x256xf32>, vector<256x2xf32>, vector<16x2xf32> -> vector<16x2xf32>
    %cst_58 = arith.constant 6.250000e-02 : f32
    %108 = vector.broadcast %cst_58 : f32 to vector<16x2xf32>
    %109 = arith.mulf %107, %108 : vector<16x2xf32>
    %cst_59 = arith.constant dense<0.000000e+00> : vector<16x256xf32>
    %110 = tpu.matmul %109, %6, %cst_59 {dimension_numbers = #tpu.dot_dimension_numbers<[1], [0], [0], [1], [0, 0, 1, 1], [], []>} : vector<16x2xf32>, vector<2x256xf32>, vector<16x256xf32> -> vector<16x256xf32>
    %cst_60 = arith.constant 9.99999993E-9 : f32
    %111 = vector.broadcast %cst_60 : f32 to vector<16x256xf32>
    %112 = arith.addf %110, %111 : vector<16x256xf32>
    %113 = tpu.reciprocal %112 : vector<16x256xf32> -> vector<16x256xf32>
    %114 = arith.mulf %106, %113 : vector<16x256xf32>
    %c0_61 = arith.constant 0 : index
    %c128_62 = arith.constant 128 : index
    %115 = vector.load %arg9[%c0_61, %c128_62] : memref<32x512xf32, #tpu.memory_space<vmem>>, vector<16x256xf32>
    tpu.vector_store %arg9[%c0_61, %c128_62], %114 {strides = array<i32>} : memref<32x512xf32, #tpu.memory_space<vmem>>, vector<16x256xf32>,
    %c0_63 = arith.constant 0 : index
    %c0_64 = arith.constant 0 : index
    %116 = vector.load %arg7[%c0_63, %c0_64] : memref<24x16xf32, #tpu.memory_space<vmem>>, vector<8x16xf32>
    %c0_65 = arith.constant 0 : index
    %c127_66 = arith.constant 127 : index
    %117 = vector.load %arg9[%c0_65, %c127_66] : memref<32x512xf32, #tpu.memory_space<vmem>>, vector<16x256xf32>
    %cst_67 = arith.constant dense<0.000000e+00> : vector<8x256xf32>
    %118 = tpu.matmul %116, %117, %cst_67 {dimension_numbers = #tpu.dot_dimension_numbers<[1], [0], [0], [1], [0, 0, 1, 1], [], []>} : vector<8x16xf32>, vector<16x256xf32>, vector<8x256xf32> -> vector<8x256xf32>
    %c8 = arith.constant 8 : index
    %c0_68 = arith.constant 0 : index
    %119 = vector.load %arg7[%c8, %c0_68] : memref<24x16xf32, #tpu.memory_space<vmem>>, vector<8x16xf32>
    %c0_69 = arith.constant 0 : index
    %c128_70 = arith.constant 128 : index
    %120 = vector.load %arg9[%c0_69, %c128_70] : memref<32x512xf32, #tpu.memory_space<vmem>>, vector<16x256xf32>
    %cst_71 = arith.constant dense<0.000000e+00> : vector<8x256xf32>
    %121 = tpu.matmul %119, %120, %cst_71 {dimension_numbers = #tpu.dot_dimension_numbers<[1], [0], [0], [1], [0, 0, 1, 1], [], []>} : vector<8x16xf32>, vector<16x256xf32>, vector<8x256xf32> -> vector<8x256xf32>
    %122 = arith.addf %118, %121 : vector<8x256xf32>
    %c16_72 = arith.constant 16 : index
    %c0_73 = arith.constant 0 : index
    %123 = vector.load %arg7[%c16_72, %c0_73] : memref<24x16xf32, #tpu.memory_space<vmem>>, vector<8x16xf32>
    %c0_74 = arith.constant 0 : index
    %c129_75 = arith.constant 129 : index
    %124 = vector.load %arg9[%c0_74, %c129_75] : memref<32x512xf32, #tpu.memory_space<vmem>>, vector<16x256xf32>
    %cst_76 = arith.constant dense<0.000000e+00> : vector<8x256xf32>
    %125 = tpu.matmul %123, %124, %cst_76 {dimension_numbers = #tpu.dot_dimension_numbers<[1], [0], [0], [1], [0, 0, 1, 1], [], []>} : vector<8x16xf32>, vector<16x256xf32>, vector<8x256xf32> -> vector<8x256xf32>
    %126 = arith.addf %122, %125 : vector<8x256xf32>
    %127 = vector.broadcast %4 : vector<1x256xf32> to vector<8x256xf32>
    %128 = arith.mulf %126, %127 : vector<8x256xf32>
    %cst_77 = arith.constant dense<0.000000e+00> : vector<8x2xf32>
    %129 = tpu.matmul %128, %5, %cst_77 {dimension_numbers = #tpu.dot_dimension_numbers<[1], [0], [0], [1], [0, 0, 1, 1], [], []>} : vector<8x256xf32>, vector<256x2xf32>, vector<8x2xf32> -> vector<8x2xf32>
    %cst_78 = arith.constant dense<0.000000e+00> : vector<8xf32>
    %130 = vector.multi_reduction <add>, %129, %cst_78 [1] : vector<8x2xf32> to vector<8xf32>
    %131 = vector.shape_cast %130 : vector<8xf32> to vector<8x1xf32>
    %cst_79 = arith.constant 3.125000e-02 : f32
    %132 = vector.broadcast %cst_79 : f32 to vector<8x1xf32>
    %133 = arith.mulf %131, %132 : vector<8x1xf32>
    %134 = vector.broadcast %133 : vector<8x1xf32> to vector<8x256xf32>
    %135 = arith.subf %128, %134 : vector<8x256xf32>
    %136 = vector.broadcast %4 : vector<1x256xf32> to vector<8x256xf32>
    %137 = arith.mulf %135, %136 : vector<8x256xf32>
    %138 = arith.mulf %137, %137 : vector<8x256xf32>
    %cst_80 = arith.constant dense<0.000000e+00> : vector<8x2xf32>
    %139 = tpu.matmul %138, %5, %cst_80 {dimension_numbers = #tpu.dot_dimension_numbers<[1], [0], [0], [1], [0, 0, 1, 1], [], []>} : vector<8x256xf32>, vector<256x2xf32>, vector<8x2xf32> -> vector<8x2xf32>
    %cst_81 = arith.constant dense<0.000000e+00> : vector<8xf32>
    %140 = vector.multi_reduction <add>, %139, %cst_81 [1] : vector<8x2xf32> to vector<8xf32>
    %141 = vector.shape_cast %140 : vector<8xf32> to vector<8x1xf32>
    %cst_82 = arith.constant 3.125000e-02 : f32
    %142 = vector.broadcast %cst_82 : f32 to vector<8x1xf32>
    %143 = arith.mulf %141, %142 : vector<8x1xf32>
    %144 = vector.extract_strided_slice %7 {offsets = [0, 4], sizes = [8, 1], strides = [1, 1]} : vector<32x6xf32> to vector<8x1xf32>
    %145 = vector.extract_strided_slice %7 {offsets = [0, 5], sizes = [8, 1], strides = [1, 1]} : vector<32x6xf32> to vector<8x1xf32>
    %cst_83 = arith.constant 9.99999974E-6 : f32
    %146 = vector.broadcast %cst_83 : f32 to vector<8x1xf32>
    %147 = arith.addf %143, %146 : vector<8x1xf32>
    %148 = math.rsqrt %147 : vector<8x1xf32>
    %149 = arith.mulf %144, %148 : vector<8x1xf32>
    %150 = vector.broadcast %149 : vector<8x1xf32> to vector<8x256xf32>
    %151 = arith.mulf %137, %150 : vector<8x256xf32>
    %152 = vector.broadcast %145 : vector<8x1xf32> to vector<8x256xf32>
    %153 = arith.addf %151, %152 : vector<8x256xf32>
    %cst_84 = arith.constant 2.000000e+01 : f32
    %154 = vector.broadcast %cst_84 : f32 to vector<8x256xf32>
    %155 = arith.cmpf ogt, %153, %154 : vector<8x256xf32>
    %156 = math.exp %153 : vector<8x256xf32>
    %157 = math.log1p %156 : vector<8x256xf32>
    %158 = arith.select %155, %153, %157 : vector<8x256xi1>, vector<8x256xf32>
    %159 = vector.broadcast %4 : vector<1x256xf32> to vector<8x256xf32>
    %160 = arith.mulf %158, %159 : vector<8x256xf32>
    %cst_85 = arith.constant dense<0.000000e+00> : vector<8x2xf32>
    %161 = tpu.matmul %160, %5, %cst_85 {dimension_numbers = #tpu.dot_dimension_numbers<[1], [0], [0], [1], [0, 0, 1, 1], [], []>} : vector<8x256xf32>, vector<256x2xf32>, vector<8x2xf32> -> vector<8x2xf32>
    %cst_86 = arith.constant 6.250000e-02 : f32
    %162 = vector.broadcast %cst_86 : f32 to vector<8x2xf32>
    %163 = arith.mulf %161, %162 : vector<8x2xf32>
    %cst_87 = arith.constant dense<0.000000e+00> : vector<8x256xf32>
    %164 = tpu.matmul %163, %6, %cst_87 {dimension_numbers = #tpu.dot_dimension_numbers<[1], [0], [0], [1], [0, 0, 1, 1], [], []>} : vector<8x2xf32>, vector<2x256xf32>, vector<8x256xf32> -> vector<8x256xf32>
    %cst_88 = arith.constant 9.99999993E-9 : f32
    %165 = vector.broadcast %cst_88 : f32 to vector<8x256xf32>
    %166 = arith.addf %164, %165 : vector<8x256xf32>
    %167 = tpu.reciprocal %166 : vector<8x256xf32> -> vector<8x256xf32>
    %168 = arith.mulf %160, %167 : vector<8x256xf32>
    %cst_89 = arith.constant dense<0.000000e+00> : vector<8x2xf32>
    %169 = tpu.matmul %168, %5, %cst_89 {dimension_numbers = #tpu.dot_dimension_numbers<[1], [0], [0], [1], [0, 0, 1, 1], [], []>} : vector<8x256xf32>, vector<256x2xf32>, vector<8x2xf32> -> vector<8x2xf32>
    %cst_90 = arith.constant 6.250000e-02 : f32
    %170 = vector.broadcast %cst_90 : f32 to vector<8x2xf32>
    %171 = arith.mulf %169, %170 : vector<8x2xf32>
    %cst_91 = arith.constant dense<0.000000e+00> : vector<8x256xf32>
    %172 = tpu.matmul %171, %6, %cst_91 {dimension_numbers = #tpu.dot_dimension_numbers<[1], [0], [0], [1], [0, 0, 1, 1], [], []>} : vector<8x2xf32>, vector<2x256xf32>, vector<8x256xf32> -> vector<8x256xf32>
    %cst_92 = arith.constant 9.99999993E-9 : f32
    %173 = vector.broadcast %cst_92 : f32 to vector<8x256xf32>
    %174 = arith.addf %172, %173 : vector<8x256xf32>
    %175 = tpu.reciprocal %174 : vector<8x256xf32> -> vector<8x256xf32>
    %176 = arith.mulf %168, %175 : vector<8x256xf32>
    %c0_93 = arith.constant 0 : index
    %c0_94 = arith.constant 0 : index
    %177 = vector.load %arg8[%c0_93, %c0_94] : memref<8x256xf32, #tpu.memory_space<vmem>>, vector<8x256xf32>
    tpu.vector_store %arg8[%c0_93, %c0_94], %176 {strides = array<i32>} : memref<8x256xf32, #tpu.memory_space<vmem>>, vector<8x256xf32>,
    return
  }
}

</mosaic_0001>

<llo_original>
// kernel: tpu_custom_call.1
$region0: #{tpu_custom_call.1}
  #allocation0 [shape = 'u32[]', space=smem, size = 0x4, offset = 0x4, fixed_abs, tag = 'smem constant byte address 0x4 - core index']
  #allocation1 [shape = 'u32[144,128]{1,0:T(1,128)}', space=vmem, size = 0x12000, scoped, tag = 'internal scratch']
  #allocation2 [shape = 'f32[32,512]{1,0:T(8,128)}', space=vmem, size = 0x10000, scoped, tag = 'scratch operand']
  %s0 = inlined_call_operand.vmem [shape: f32[8,512], index: 0, kind: input, shape index: {}]
  %s1 = inlined_call_operand.vmem [shape: f32[32,6], index: 1, kind: input, shape index: {}]
  %s2 = inlined_call_operand.vmem [shape: f32[256,2], index: 2, kind: input, shape index: {}]
  %s3 = inlined_call_operand.vmem [shape: f32[2,256], index: 3, kind: input, shape index: {}]
  %s4 = inlined_call_operand.vmem [shape: f32[1,256], index: 4, kind: input, shape index: {}]
  %s5 = inlined_call_operand.vmem [shape: f32[96,8], index: 5, kind: input, shape index: {}]
  %s6 = inlined_call_operand.vmem [shape: f32[48,32], index: 6, kind: input, shape index: {}]
  %s7 = inlined_call_operand.vmem [shape: f32[24,16], index: 7, kind: input, shape index: {}]
  %s8 = inlined_call_operand.hbm [shape: f32[8,256], index: 8, kind: output, shape index: {}]
  %s9 = sld [smem:[#allocation0]]
  $region42: #{tpu_custom_call.1} parent=0
    _
  %s11 = ssub.s32 1, %s9
  %s12 = scalar_select 0, %s11, %s9
  $region1: #{tpu_custom_call.1} parent=0
    #allocation3 [shape = 'u8[8192]{0}', space=vmem, size = 0x2000, scoped, tag = 'output window, operand 0, single buffered']
    #allocation4 [shape = 's32[1]{0}', space=sflag, size = 0x4, scoped, tag = 'scoped memory for tpu_custom_call.1']
    %13 = vsyncpa [#allocation4], 0
    // Predicated region
    $region2: #{tpu_custom_call.1} parent=1 // pred_check
      _
    $region3: #{tpu_custom_call.1} parent=1 // pred_check_branch
      %15 = sbr.rel (0) target = $region5
    $region4: #{tpu_custom_call.1} parent=1 // pred_region
      _
    $region5: #{tpu_custom_call.1} parent=1 // pred_fallthru
      _
    // Predicated region
    $region6: #{tpu_custom_call.1} parent=1 // pred_check
      _
    $region7: #{tpu_custom_call.1} parent=1 // pred_check_branch
      %17 = sbr.rel (0) target = $region9
    $region8: #{tpu_custom_call.1} parent=1 // pred_region
      _
    $region9: #{tpu_custom_call.1} parent=1 // pred_fallthru
      _
    // Predicated region
    $region10: #{tpu_custom_call.1} parent=1 // pred_check
      _
    $region11: #{tpu_custom_call.1} parent=1 // pred_check_branch
      %19 = sbr.rel (0) target = $region13
    $region12: #{tpu_custom_call.1} parent=1 // pred_region
      _
    $region13: #{tpu_custom_call.1} parent=1 // pred_fallthru
      _
    // Predicated region
    $region14: #{tpu_custom_call.1} parent=1 // pred_check
      _
    $region15: #{tpu_custom_call.1} parent=1 // pred_check_branch
      %21 = sbr.rel (0) target = $region17
    $region16: #{tpu_custom_call.1} parent=1 // pred_region
      _
    $region17: #{tpu_custom_call.1} parent=1 // pred_fallthru
      _
    // Predicated region
    $region18: #{tpu_custom_call.1} parent=1 // pred_check
      _
    $region19: #{tpu_custom_call.1} parent=1 // pred_check_branch
      %23 = sbr.rel (0) target = $region21
    $region20: #{tpu_custom_call.1} parent=1 // pred_region
      _
    $region21: #{tpu_custom_call.1} parent=1 // pred_fallthru
      _
    // Predicated region
    $region22: #{tpu_custom_call.1} parent=1 // pred_check
      _
    $region23: #{tpu_custom_call.1} parent=1 // pred_check_branch
      %25 = sbr.rel (0) target = $region25
    $region24: #{tpu_custom_call.1} parent=1 // pred_region
      _
    $region25: #{tpu_custom_call.1} parent=1 // pred_fallthru
      _
    // Predicated region
    $region26: #{tpu_custom_call.1} parent=1 // pred_check
      _
    $region27: #{tpu_custom_call.1} parent=1 // pred_check_branch
      %27 = sbr.rel (0) target = $region29
    $region28: #{tpu_custom_call.1} parent=1 // pred_region
      _
    $region29: #{tpu_custom_call.1} parent=1 // pred_fallthru
      _
    // Predicated region
    $region30: #{tpu_custom_call.1} parent=1 // pred_check
      _
    $region31: #{tpu_custom_call.1} parent=1 // pred_check_branch
      %29 = sbr.rel (0) target = $region33
    $region32: #{tpu_custom_call.1} parent=1 // pred_region
      _
    $region33: #{tpu_custom_call.1} parent=1 // pred_fallthru
      _
    %30 = vst [vmem:[#allocation2] sm:$0xff] 0.0
    %31 = vst [vmem:[#allocation2 + $0x20] sm:$0xff] 0.0
    %32 = vst [vmem:[#allocation2 + $0x40] sm:$0xff] 0.0
    %33 = vst [vmem:[#allocation2 + $0x60] sm:$0xff] 0.0
    %34 = vst [vmem:[#allocation2 + $0x18] sm:$0xff] 0.0
    %35 = vst [vmem:[#allocation2 + $0x38] sm:$0xff] 0.0
    %36 = vst [vmem:[#allocation2 + $0x58] sm:$0xff] 0.0
    %37 = vst [vmem:[#allocation2 + $0x78] sm:$0xff] 0.0
    %v38 = vld [vmem:[%s4] sm:$0x3]
    %v39 = vld [vmem:[%s2] sm:$0xff]
    %v40 = vld [vmem:[%s2 + $0x8] sm:$0xff]
    %v41 = vld [vmem:[%s2 + $0x10] sm:$0xff]
    %v42 = vld [vmem:[%s2 + $0x18] sm:$0xff]
    %v43 = vld [vmem:[%s2 + $0x20] sm:$0xff]
    %v44 = vld [vmem:[%s2 + $0x28] sm:$0xff]
    %v45 = vld [vmem:[%s2 + $0x30] sm:$0xff]
    %v46 = vld [vmem:[%s2 + $0x38] sm:$0xff]
    %v47 = vld [vmem:[%s2 + $0x40] sm:$0xff]
    %v48 = vld [vmem:[%s2 + $0x48] sm:$0xff]
    %v49 = vld [vmem:[%s2 + $0x50] sm:$0xff]
    %v50 = vld [vmem:[%s2 + $0x58] sm:$0xff]
    %v51 = vld [vmem:[%s2 + $0x60] sm:$0xff]
    %v52 = vld [vmem:[%s2 + $0x68] sm:$0xff]
    %v53 = vld [vmem:[%s2 + $0x70] sm:$0xff]
    %v54 = vld [vmem:[%s2 + $0x78] sm:$0xff]
    %v55 = vld [vmem:[%s2 + $0x80] sm:$0xff]
    %v56 = vld [vmem:[%s2 + $0x88] sm:$0xff]
    %v57 = vld [vmem:[%s2 + $0x90] sm:$0xff]
    %v58 = vld [vmem:[%s2 + $0x98] sm:$0xff]
    %v59 = vld [vmem:[%s2 + $0xa0] sm:$0xff]
    %v60 = vld [vmem:[%s2 + $0xa8] sm:$0xff]
    %v61 = vld [vmem:[%s2 + $0xb0] sm:$0xff]
    %v62 = vld [vmem:[%s2 + $0xb8] sm:$0xff]
    %v63 = vld [vmem:[%s2 + $0xc0] sm:$0xff]
    %v64 = vld [vmem:[%s2 + $0xc8] sm:$0xff]
    %v65 = vld [vmem:[%s2 + $0xd0] sm:$0xff]
    %v66 = vld [vmem:[%s2 + $0xd8] sm:$0xff]
    %v67 = vld [vmem:[%s2 + $0xe0] sm:$0xff]
    %v68 = vld [vmem:[%s2 + $0xe8] sm:$0xff]
    %v69 = vld [vmem:[%s2 + $0xf0] sm:$0xff]
    %v70 = vld [vmem:[%s2 + $0xf8] sm:$0xff]
    %v71 = vld [vmem:[%s3] sm:$0xf]
    %v72 = vld [vmem:[%s1] sm:$0xff]
    %v73 = vld [vmem:[%s1 + $0x8] sm:$0xff]
    %v74 = vld [vmem:[%s1 + $0x10] sm:$0xff]
    %v75 = vld [vmem:[%s1 + $0x18] sm:$0xff]
    %v76 = vld [vmem:[%s5] sm:$0xff]
    %v77 = vld [vmem:[%s5 + $0x8] sm:$0xff]
    %v78 = vld [vmem:[%s5 + $0x10] sm:$0xff]
    %v79 = vld [vmem:[%s5 + $0x18] sm:$0xff]
    %v80 = vld [vmem:[%s0] sm:$0xff]
    %v81 = vld [vmem:[%s0 + $0x8] sm:$0xff]
    %v82 = vld [vmem:[%s0 + $0x10] sm:$0xff]
    %v83 = vld [vmem:[%s5 + $0x20] sm:$0xff]
    %v84 = vld [vmem:[%s5 + $0x28] sm:$0xff]
    %v85 = vld [vmem:[%s5 + $0x30] sm:$0xff]
    %v86 = vld [vmem:[%s5 + $0x38] sm:$0xff]
    %vm87 = vcmask 64512
    %v89 = vsel %vm87, %v83, 0
    %v92 = vsel %vm87, %v84, 0
    %v95 = vsel %vm87, %v85, 0
    %v98 = vsel %vm87, %v86, 0
    %100 = vmatprep.subr.mxu0 0.0
    %101 = vmatpush1.msra.mxu0 0.0
    %102 = vmatprep.subr.mxu0 0.0
    %103 = vmatpush1.msra.mxu0 0.0
    %104 = vmatprep.subr.mxu0 0.0
    %105 = vmatpush1.msra.mxu0 0.0
    %106 = vmatprep.subr.mxu0 0.0
    %107 = vmatpush1.msra.mxu0 0.0
    %108 = vmatprep.subr.mxu0 0.0
    %109 = vmatpush1.msra.mxu0 0.0
    %110 = vmatprep.subr.mxu0 0.0
    %111 = vmatpush1.msra.mxu0 0.0
    %112 = vmatprep.subr.mxu0 0.0
    %113 = vmatpush1.msra.mxu0 0.0
    %114 = vmatprep.subr.mxu0 0.0
    %115 = vmatpush1.msra.mxu0 0.0
    %116 = vmatprep.subr.mxu0 0.0
    %117 = vmatpush1.msra.mxu0 0.0
    %118 = vmatprep.subr.mxu0 0.0
    %119 = vmatpush1.msra.mxu0 0.0
    %120 = vmatprep.subr.mxu0 0.0
    %121 = vmatpush1.msra.mxu0 0.0
    %122 = vmatprep.subr.mxu0 0.0
    %123 = vmatpush1.msra.mxu0 0.0
    %124 = vmatprep.subr.mxu0 0.0
    %125 = vmatpush1.msra.mxu0 0.0
    %126 = vmatprep.subr.mxu0 0.0
    %127 = vmatpush1.msra.mxu0 0.0
    %128 = vmatprep.subr.mxu0 0.0
    %129 = vmatpush1.msra.mxu0 0.0
    %130 = vmatprep.subr.mxu0 %v82
    %131 = vmatpush1.msra.mxu0 %v81
    %132 = vmatprep.subr.mxu0 0.0
    %133 = vmatpush2.msra.mxu0 0.0
    %134 = vmatprep.subr.mxu0 0.0
    %135 = vmatpush2.msra.mxu0 0.0
    %136 = vmatprep.subr.mxu0 0.0
    %137 = vmatpush2.msra.mxu0 0.0
    %138 = vmatprep.subr.mxu0 0.0
    %139 = vmatpush2.msra.mxu0 0.0
    %140 = vmatprep.subr.mxu0 0.0
    %141 = vmatpush2.msra.mxu0 0.0
    %142 = vmatprep.subr.mxu0 0.0
    %143 = vmatpush2.msra.mxu0 0.0
    %144 = vmatprep.subr.mxu0 0.0
    %145 = vmatpush2.msra.mxu0 0.0
    %146 = vmatprep.subr.mxu0 0.0
    %147 = vmatpush2.msra.mxu0 0.0
    %148 = vmatprep.subr.mxu0 0.0
    %149 = vmatpush2.msra.mxu0 0.0
    %150 = vmatprep.subr.mxu0 0.0
    %151 = vmatpush2.msra.mxu0 0.0
    %152 = vmatprep.subr.mxu0 0.0
    %153 = vmatpush2.msra.mxu0 0.0
    %154 = vmatprep.subr.mxu0 0.0
    %155 = vmatpush2.msra.mxu0 0.0
    %156 = vmatprep.subr.mxu0 0.0
    %157 = vmatpush2.msra.mxu0 0.0
    %158 = vmatprep.subr.mxu0 0.0
    %159 = vmatpush2.msra.mxu0 0.0
    %160 = vmatprep.subr.mxu0 0.0
    %161 = vmatpush2.msra.mxu0 0.0
    %162 = vmatprep.subr.mxu0 0.0
    %163 = vmatpush2.msra.mxu0 0.0
    %164 = vmatprep.mubr.f32.mxu0 0.0
    %165 = vmatmul.mubr.f32.gmra.mxu0 %v89
    %v166 = vpop.f32.mrf.mxu0
    %v167 = vadd.f32 0.0, %v166
    %v168 = vpop.f32.mrf.mxu0
    %v169 = vadd.f32 0.0, %v168
    %170 = vmatprep.mubr.f32.mxu0 0.0
    %171 = vmatmul.mubr.f32.gmra.mxu0 %v92
    %v172 = vpop.f32.mrf.mxu0
    %v173 = vadd.f32 0.0, %v172
    %v174 = vpop.f32.mrf.mxu0
    %v175 = vadd.f32 0.0, %v174
    %176 = vmatprep.mubr.f32.mxu0 0.0
    %177 = vmatmul.mubr.f32.gmra.mxu0 %v95
    %v178 = vpop.f32.mrf.mxu0
    %v179 = vadd.f32 0.0, %v178
    %v180 = vpop.f32.mrf.mxu0
    %v181 = vadd.f32 0.0, %v180
    %182 = vmatprep.mubr.f32.mxu0 0.0
    %183 = vmatmul.mubr.f32.gmra.mxu0 %v98
    %v184 = vpop.f32.mrf.mxu0
    %v185 = vadd.f32 0.0, %v184
    %v186 = vpop.f32.mrf.mxu0
    %v187 = vadd.f32 0.0, %v186
    %188 = vdwg.mxu0
    %192 = vrot.lane.b32.xlu0 %v80, 1
    %v193 = vpop.permute.xlu0 %192
    %194 = vrot.lane.b32.xlu0 %v81, 1
    %v195 = vpop.permute.xlu0 %194
    %196 = vrot.lane.b32.xlu0 %v82, 1
    %v197 = vpop.permute.xlu0 %196
    %vm198 = vcmask 7168
    %v199 = vsel %vm198, %v193, %v195
    %v200 = vsel %vm198, %v195, %v197
    %v204 = vsel %vm87, %v76, 0
    %v207 = vsel %vm87, %v77, 0
    %v210 = vsel %vm87, %v78, 0
    %v213 = vsel %vm87, %v79, 0
    %215 = vmatprep.subr.mxu0 0.0
    %216 = vmatpush1.msra.mxu0 0.0
    %217 = vmatprep.subr.mxu0 0.0
    %218 = vmatpush1.msra.mxu0 0.0
    %219 = vmatprep.subr.mxu0 0.0
    %220 = vmatpush1.msra.mxu0 0.0
    %221 = vmatprep.subr.mxu0 0.0
    %222 = vmatpush1.msra.mxu0 0.0
    %223 = vmatprep.subr.mxu0 0.0
    %224 = vmatpush1.msra.mxu0 0.0
    %225 = vmatprep.subr.mxu0 0.0
    %226 = vmatpush1.msra.mxu0 0.0
    %227 = vmatprep.subr.mxu0 0.0
    %228 = vmatpush1.msra.mxu0 0.0
    %229 = vmatprep.subr.mxu0 0.0
    %230 = vmatpush1.msra.mxu0 0.0
    %231 = vmatprep.subr.mxu0 0.0
    %232 = vmatpush1.msra.mxu0 0.0
    %233 = vmatprep.subr.mxu0 0.0
    %234 = vmatpush1.msra.mxu0 0.0
    %235 = vmatprep.subr.mxu0 0.0
    %236 = vmatpush1.msra.mxu0 0.0
    %237 = vmatprep.subr.mxu0 0.0
    %238 = vmatpush1.msra.mxu0 0.0
    %239 = vmatprep.subr.mxu0 0.0
    %240 = vmatpush1.msra.mxu0 0.0
    %241 = vmatprep.subr.mxu0 0.0
    %242 = vmatpush1.msra.mxu0 0.0
    %243 = vmatprep.subr.mxu0 0.0
    %244 = vmatpush1.msra.mxu0 0.0
    %245 = vmatprep.subr.mxu0 %v200
    %246 = vmatpush1.msra.mxu0 %v199
    %247 = vmatprep.subr.mxu0 0.0
    %248 = vmatpush2.msra.mxu0 0.0
    %249 = vmatprep.subr.mxu0 0.0
    %250 = vmatpush2.msra.mxu0 0.0
    %251 = vmatprep.subr.mxu0 0.0
    %252 = vmatpush2.msra.mxu0 0.0
    %253 = vmatprep.subr.mxu0 0.0
    %254 = vmatpush2.msra.mxu0 0.0
    %255 = vmatprep.subr.mxu0 0.0
    %256 = vmatpush2.msra.mxu0 0.0
    %257 = vmatprep.subr.mxu0 0.0
    %258 = vmatpush2.msra.mxu0 0.0
    %259 = vmatprep.subr.mxu0 0.0
    %260 = vmatpush2.msra.mxu0 0.0
    %261 = vmatprep.subr.mxu0 0.0
    %262 = vmatpush2.msra.mxu0 0.0
    %263 = vmatprep.subr.mxu0 0.0
    %264 = vmatpush2.msra.mxu0 0.0
    %265 = vmatprep.subr.mxu0 0.0
    %266 = vmatpush2.msra.mxu0 0.0
    %267 = vmatprep.subr.mxu0 0.0
    %268 = vmatpush2.msra.mxu0 0.0
    %269 = vmatprep.subr.mxu0 0.0
    %270 = vmatpush2.msra.mxu0 0.0
    %271 = vmatprep.subr.mxu0 0.0
    %272 = vmatpush2.msra.mxu0 0.0
    %273 = vmatprep.subr.mxu0 0.0
    %274 = vmatpush2.msra.mxu0 0.0
    %275 = vmatprep.subr.mxu0 0.0
    %276 = vmatpush2.msra.mxu0 0.0
    %277 = vmatprep.subr.mxu0 0.0
    %278 = vmatpush2.msra.mxu0 0.0
    %279 = vmatprep.mubr.f32.mxu0 0.0
    %280 = vmatmul.mubr.f32.gmra.mxu0 %v204
    %v281 = vpop.f32.mrf.mxu0
    %v282 = vadd.f32 %v167, %v281
    %v283 = vpop.f32.mrf.mxu0
    %v284 = vadd.f32 %v169, %v283
    %285 = vmatprep.mubr.f32.mxu0 0.0
    %286 = vmatmul.mubr.f32.gmra.mxu0 %v207
    %v287 = vpop.f32.mrf.mxu0
    %v288 = vadd.f32 %v173, %v287
    %v289 = vpop.f32.mrf.mxu0
    %v290 = vadd.f32 %v175, %v289
    %291 = vmatprep.mubr.f32.mxu0 0.0
    %292 = vmatmul.mubr.f32.gmra.mxu0 %v210
    %v293 = vpop.f32.mrf.mxu0
    %v294 = vadd.f32 %v179, %v293
    %v295 = vpop.f32.mrf.mxu0
    %v296 = vadd.f32 %v181, %v295
    %297 = vmatprep.mubr.f32.mxu0 0.0
    %298 = vmatmul.mubr.f32.gmra.mxu0 %v213
    %v299 = vpop.f32.mrf.mxu0
    %v300 = vadd.f32 %v185, %v299
    %v301 = vpop.f32.mrf.mxu0
    %v302 = vadd.f32 %v187, %v301
    %303 = vdwg.mxu0
    %v304 = vld [vmem:[%s5 + $0x40] sm:$0xff]
    %v305 = vld [vmem:[%s5 + $0x48] sm:$0xff]
    %v306 = vld [vmem:[%s5 + $0x50] sm:$0xff]
    %v307 = vld [vmem:[%s5 + $0x58] sm:$0xff]
    %v308 = vld [vmem:[%s0 + $0x8] sm:$0xff]
    %v309 = vld [vmem:[%s0 + $0x10] sm:$0xff]
    %v310 = vld [vmem:[%s0 + $0x18] sm:$0xff]
    %314 = vrot.lane.b32.xlu0 %v308, 127
    %v315 = vpop.permute.xlu0 %314
    %316 = vrot.lane.b32.xlu0 %v309, 127
    %v317 = vpop.permute.xlu0 %316
    %318 = vrot.lane.b32.xlu0 %v310, 127
    %v319 = vpop.permute.xlu0 %318
    %vm320 = vcmask 1039360
    %v321 = vsel %vm320, %v315, %v317
    %v322 = vsel %vm320, %v317, %v319
    %v326 = vsel %vm87, %v304, 0
    %v329 = vsel %vm87, %v305, 0
    %v332 = vsel %vm87, %v306, 0
    %v335 = vsel %vm87, %v307, 0
    %337 = vmatprep.subr.mxu0 0.0
    %338 = vmatpush1.msra.mxu0 0.0
    %339 = vmatprep.subr.mxu0 0.0
    %340 = vmatpush1.msra.mxu0 0.0
    %341 = vmatprep.subr.mxu0 0.0
    %342 = vmatpush1.msra.mxu0 0.0
    %343 = vmatprep.subr.mxu0 0.0
    %344 = vmatpush1.msra.mxu0 0.0
    %345 = vmatprep.subr.mxu0 0.0
    %346 = vmatpush1.msra.mxu0 0.0
    %347 = vmatprep.subr.mxu0 0.0
    %348 = vmatpush1.msra.mxu0 0.0
    %349 = vmatprep.subr.mxu0 0.0
    %350 = vmatpush1.msra.mxu0 0.0
    %351 = vmatprep.subr.mxu0 0.0
    %352 = vmatpush1.msra.mxu0 0.0
    %353 = vmatprep.subr.mxu0 0.0
    %354 = vmatpush1.msra.mxu0 0.0
    %355 = vmatprep.subr.mxu0 0.0
    %356 = vmatpush1.msra.mxu0 0.0
    %357 = vmatprep.subr.mxu0 0.0
    %358 = vmatpush1.msra.mxu0 0.0
    %359 = vmatprep.subr.mxu0 0.0
    %360 = vmatpush1.msra.mxu0 0.0
    %361 = vmatprep.subr.mxu0 0.0
    %362 = vmatpush1.msra.mxu0 0.0
    %363 = vmatprep.subr.mxu0 0.0
    %364 = vmatpush1.msra.mxu0 0.0
    %365 = vmatprep.subr.mxu0 0.0
    %366 = vmatpush1.msra.mxu0 0.0
    %367 = vmatprep.subr.mxu0 %v322
    %368 = vmatpush1.msra.mxu0 %v321
    %369 = vmatprep.subr.mxu0 0.0
    %370 = vmatpush2.msra.mxu0 0.0
    %371 = vmatprep.subr.mxu0 0.0
    %372 = vmatpush2.msra.mxu0 0.0
    %373 = vmatprep.subr.mxu0 0.0
    %374 = vmatpush2.msra.mxu0 0.0
    %375 = vmatprep.subr.mxu0 0.0
    %376 = vmatpush2.msra.mxu0 0.0
    %377 = vmatprep.subr.mxu0 0.0
    %378 = vmatpush2.msra.mxu0 0.0
    %379 = vmatprep.subr.mxu0 0.0
    %380 = vmatpush2.msra.mxu0 0.0
    %381 = vmatprep.subr.mxu0 0.0
    %382 = vmatpush2.msra.mxu0 0.0
    %383 = vmatprep.subr.mxu0 0.0
    %384 = vmatpush2.msra.mxu0 0.0
    %385 = vmatprep.subr.mxu0 0.0
    %386 = vmatpush2.msra.mxu0 0.0
    %387 = vmatprep.subr.mxu0 0.0
    %388 = vmatpush2.msra.mxu0 0.0
    %389 = vmatprep.subr.mxu0 0.0
    %390 = vmatpush2.msra.mxu0 0.0
    %391 = vmatprep.subr.mxu0 0.0
    %392 = vmatpush2.msra.mxu0 0.0
    %393 = vmatprep.subr.mxu0 0.0
    %394 = vmatpush2.msra.mxu0 0.0
    %395 = vmatprep.subr.mxu0 0.0
    %396 = vmatpush2.msra.mxu0 0.0
    %397 = vmatprep.subr.mxu0 0.0
    %398 = vmatpush2.msra.mxu0 0.0
    %399 = vmatprep.subr.mxu0 0.0
    %400 = vmatpush2.msra.mxu0 0.0
    %401 = vmatprep.mubr.f32.mxu0 0.0
    %402 = vmatmul.mubr.f32.gmra.mxu0 %v326
    %v403 = vpop.f32.mrf.mxu0
    %v404 = vadd.f32 0.0, %v403
    %v405 = vpop.f32.mrf.mxu0
    %v406 = vadd.f32 0.0, %v405
    %407 = vmatprep.mubr.f32.mxu0 0.0
    %408 = vmatmul.mubr.f32.gmra.mxu0 %v329
    %v409 = vpop.f32.mrf.mxu0
    %v410 = vadd.f32 0.0, %v409
    %v411 = vpop.f32.mrf.mxu0
    %v412 = vadd.f32 0.0, %v411
    %413 = vmatprep.mubr.f32.mxu0 0.0
    %414 = vmatmul.mubr.f32.gmra.mxu0 %v332
    %v415 = vpop.f32.mrf.mxu0
    %v416 = vadd.f32 0.0, %v415
    %v417 = vpop.f32.mrf.mxu0
    %v418 = vadd.f32 0.0, %v417
    %419 = vmatprep.mubr.f32.mxu0 0.0
    %420 = vmatmul.mubr.f32.gmra.mxu0 %v335
    %v421 = vpop.f32.mrf.mxu0
    %v422 = vadd.f32 0.0, %v421
    %v423 = vpop.f32.mrf.mxu0
    %v424 = vadd.f32 0.0, %v423
    %425 = vdwg.mxu0
    %v426 = vadd.f32 %v282, %v404
    %v427 = vadd.f32 %v284, %v406
    %v428 = vadd.f32 %v288, %v410
    %v429 = vadd.f32 %v290, %v412
    %v430 = vadd.f32 %v294, %v416
    %v431 = vadd.f32 %v296, %v418
    %v432 = vadd.f32 %v300, %v422
    %v433 = vadd.f32 %v302, %v424
    %v435 = vlaneseq
    %v436 = vshrl.u32 %v435, 7
    %v437 = vsub.s32 0, %v436
    %v438 = vrot.slane %v38, %v437
    %v439 = vlaneseq
    %v440 = vshrl.u32 %v439, 7
    %v441 = vsub.s32 1, %v440
    %v442 = vrot.slane %v38, %v441
    %v445 = vmul.f32 %v426, %v438
    %v446 = vmul.f32 %v427, %v442
    %v447 = vmul.f32 %v428, %v438
    %v448 = vmul.f32 %v429, %v442
    %v449 = vmul.f32 %v430, %v438
    %v450 = vmul.f32 %v431, %v442
    %v451 = vmul.f32 %v432, %v438
    %v452 = vmul.f32 %v433, %v442
    %453 = vmatprep.subr.mxu0 0.0
    %454 = vmatpush1.msra.mxu0 %v54
    %455 = vmatprep.subr.mxu0 0.0
    %456 = vmatpush1.msra.mxu0 %v53
    %457 = vmatprep.subr.mxu0 0.0
    %458 = vmatpush1.msra.mxu0 %v52
    %459 = vmatprep.subr.mxu0 0.0
    %460 = vmatpush1.msra.mxu0 %v51
    %461 = vmatprep.subr.mxu0 0.0
    %462 = vmatpush1.msra.mxu0 %v50
    %463 = vmatprep.subr.mxu0 0.0
    %464 = vmatpush1.msra.mxu0 %v49
    %465 = vmatprep.subr.mxu0 0.0
    %466 = vmatpush1.msra.mxu0 %v48
    %467 = vmatprep.subr.mxu0 0.0
    %468 = vmatpush1.msra.mxu0 %v47
    %469 = vmatprep.subr.mxu0 0.0
    %470 = vmatpush1.msra.mxu0 %v46
    %471 = vmatprep.subr.mxu0 0.0
    %472 = vmatpush1.msra.mxu0 %v45
    %473 = vmatprep.subr.mxu0 0.0
    %474 = vmatpush1.msra.mxu0 %v44
    %475 = vmatprep.subr.mxu0 0.0
    %476 = vmatpush1.msra.mxu0 %v43
    %477 = vmatprep.subr.mxu0 0.0
    %478 = vmatpush1.msra.mxu0 %v42
    %479 = vmatprep.subr.mxu0 0.0
    %480 = vmatpush1.msra.mxu0 %v41
    %481 = vmatprep.subr.mxu0 0.0
    %482 = vmatpush1.msra.mxu0 %v40
    %483 = vmatprep.subr.mxu0 0.0
    %484 = vmatpush1.msra.mxu0 %v39
    %485 = vmatprep.subr.mxu0 0.0
    %486 = vmatpush2.msra.mxu0 %v70
    %487 = vmatprep.subr.mxu0 0.0
    %488 = vmatpush2.msra.mxu0 %v69
    %489 = vmatprep.subr.mxu0 0.0
    %490 = vmatpush2.msra.mxu0 %v68
    %491 = vmatprep.subr.mxu0 0.0
    %492 = vmatpush2.msra.mxu0 %v67
    %493 = vmatprep.subr.mxu0 0.0
    %494 = vmatpush2.msra.mxu0 %v66
    %495 = vmatprep.subr.mxu0 0.0
    %496 = vmatpush2.msra.mxu0 %v65
    %497 = vmatprep.subr.mxu0 0.0
    %498 = vmatpush2.msra.mxu0 %v64
    %499 = vmatprep.subr.mxu0 0.0
    %500 = vmatpush2.msra.mxu0 %v63
    %501 = vmatprep.subr.mxu0 0.0
    %502 = vmatpush2.msra.mxu0 %v62
    %503 = vmatprep.subr.mxu0 0.0
    %504 = vmatpush2.msra.mxu0 %v61
    %505 = vmatprep.subr.mxu0 0.0
    %506 = vmatpush2.msra.mxu0 %v60
    %507 = vmatprep.subr.mxu0 0.0
    %508 = vmatpush2.msra.mxu0 %v59
    %509 = vmatprep.subr.mxu0 0.0
    %510 = vmatpush2.msra.mxu0 %v58
    %511 = vmatprep.subr.mxu0 0.0
    %512 = vmatpush2.msra.mxu0 %v57
    %513 = vmatprep.subr.mxu0 0.0
    %514 = vmatpush2.msra.mxu0 %v56
    %515 = vmatprep.subr.mxu0 0.0
    %516 = vmatpush2.msra.mxu0 %v55
    %517 = vmatprep.mubr.f32.mxu0 %v446
    %518 = vmatmul.mubr.f32.gmra.mxu0 %v445
    %v519 = vpop.f32.mrf.mxu0
    %v520 = vadd.f32 0.0, %v519
    %v521 = vpop.f32.mrf.mxu0
    %522 = vmatprep.mubr.f32.mxu0 %v448
    %523 = vmatmul.mubr.f32.gmra.mxu0 %v447
    %v524 = vpop.f32.mrf.mxu0
    %v525 = vadd.f32 0.0, %v524
    %v526 = vpop.f32.mrf.mxu0
    %527 = vmatprep.mubr.f32.mxu0 %v450
    %528 = vmatmul.mubr.f32.gmra.mxu0 %v449
    %v529 = vpop.f32.mrf.mxu0
    %v530 = vadd.f32 0.0, %v529
    %v531 = vpop.f32.mrf.mxu0
    %532 = vmatprep.mubr.f32.mxu0 %v452
    %533 = vmatmul.mubr.f32.gmra.mxu0 %v451
    %v534 = vpop.f32.mrf.mxu0
    %v535 = vadd.f32 0.0, %v534
    %v536 = vpop.f32.mrf.mxu0
    %537 = vdwg.mxu0
    %vm538 = vcmask 15360
    %v539 = vsel %vm538, %v520, 0.0
    %540 = vadd.xlane.f32.xlu0 %v539
    %v541 = vpop.xlane.xlu0 %540
    %v542 = vsel %vm538, %v525, 0.0
    %543 = vadd.xlane.f32.xlu0 %v542
    %v544 = vpop.xlane.xlu0 %543
    %v545 = vsel %vm538, %v530, 0.0
    %546 = vadd.xlane.f32.xlu0 %v545
    %v547 = vpop.xlane.xlu0 %546
    %v548 = vsel %vm538, %v535, 0.0
    %549 = vadd.xlane.f32.xlu0 %v548
    %v550 = vpop.xlane.xlu0 %549
    %v551 = vmul.f32 %v541, 0.03125
    %v552 = vmul.f32 %v544, 0.03125
    %v553 = vmul.f32 %v547, 0.03125
    %v554 = vmul.f32 %v550, 0.03125
    %v555 = vsub.f32 %v445, %v551
    %v556 = vsub.f32 %v446, %v551
    %v557 = vsub.f32 %v447, %v552
    %v558 = vsub.f32 %v448, %v552
    %v559 = vsub.f32 %v449, %v553
    %v560 = vsub.f32 %v450, %v553
    %v561 = vsub.f32 %v451, %v554
    %v562 = vsub.f32 %v452, %v554
    %v563 = vmul.f32 %v555, %v438
    %v564 = vmul.f32 %v556, %v442
    %v565 = vmul.f32 %v557, %v438
    %v566 = vmul.f32 %v558, %v442
    %v567 = vmul.f32 %v559, %v438
    %v568 = vmul.f32 %v560, %v442
    %v569 = vmul.f32 %v561, %v438
    %v570 = vmul.f32 %v562, %v442
    %v571 = vmul.f32 %v563, %v563
    %v572 = vmul.f32 %v564, %v564
    %v573 = vmul.f32 %v565, %v565
    %v574 = vmul.f32 %v566, %v566
    %v575 = vmul.f32 %v567, %v567
    %v576 = vmul.f32 %v568, %v568
    %v577 = vmul.f32 %v569, %v569
    %v578 = vmul.f32 %v570, %v570
    %579 = vmatprep.subr.mxu0 0.0
    %580 = vmatpush1.msra.mxu0 %v54
    %581 = vmatprep.subr.mxu0 0.0
    %582 = vmatpush1.msra.mxu0 %v53
    %583 = vmatprep.subr.mxu0 0.0
    %584 = vmatpush1.msra.mxu0 %v52
    %585 = vmatprep.subr.mxu0 0.0
    %586 = vmatpush1.msra.mxu0 %v51
    %587 = vmatprep.subr.mxu0 0.0
    %588 = vmatpush1.msra.mxu0 %v50
    %589 = vmatprep.subr.mxu0 0.0
    %590 = vmatpush1.msra.mxu0 %v49
    %591 = vmatprep.subr.mxu0 0.0
    %592 = vmatpush1.msra.mxu0 %v48
    %593 = vmatprep.subr.mxu0 0.0
    %594 = vmatpush1.msra.mxu0 %v47
    %595 = vmatprep.subr.mxu0 0.0
    %596 = vmatpush1.msra.mxu0 %v46
    %597 = vmatprep.subr.mxu0 0.0
    %598 = vmatpush1.msra.mxu0 %v45
    %599 = vmatprep.subr.mxu0 0.0
    %600 = vmatpush1.msra.mxu0 %v44
    %601 = vmatprep.subr.mxu0 0.0
    %602 = vmatpush1.msra.mxu0 %v43
    %603 = vmatprep.subr.mxu0 0.0
    %604 = vmatpush1.msra.mxu0 %v42
    %605 = vmatprep.subr.mxu0 0.0
    %606 = vmatpush1.msra.mxu0 %v41
    %607 = vmatprep.subr.mxu0 0.0
    %608 = vmatpush1.msra.mxu0 %v40
    %609 = vmatprep.subr.mxu0 0.0
    %610 = vmatpush1.msra.mxu0 %v39
    %611 = vmatprep.subr.mxu0 0.0
    %612 = vmatpush2.msra.mxu0 %v70
    %613 = vmatprep.subr.mxu0 0.0
    %614 = vmatpush2.msra.mxu0 %v69
    %615 = vmatprep.subr.mxu0 0.0
    %616 = vmatpush2.msra.mxu0 %v68
    %617 = vmatprep.subr.mxu0 0.0
    %618 = vmatpush2.msra.mxu0 %v67
    %619 = vmatprep.subr.mxu0 0.0
    %620 = vmatpush2.msra.mxu0 %v66
    %621 = vmatprep.subr.mxu0 0.0
    %622 = vmatpush2.msra.mxu0 %v65
    %623 = vmatprep.subr.mxu0 0.0
    %624 = vmatpush2.msra.mxu0 %v64
    %625 = vmatprep.subr.mxu0 0.0
    %626 = vmatpush2.msra.mxu0 %v63
    %627 = vmatprep.subr.mxu0 0.0
    %628 = vmatpush2.msra.mxu0 %v62
    %629 = vmatprep.subr.mxu0 0.0
    %630 = vmatpush2.msra.mxu0 %v61
    %631 = vmatprep.subr.mxu0 0.0
    %632 = vmatpush2.msra.mxu0 %v60
    %633 = vmatprep.subr.mxu0 0.0
    %634 = vmatpush2.msra.mxu0 %v59
    %635 = vmatprep.subr.mxu0 0.0
    %636 = vmatpush2.msra.mxu0 %v58
    %637 = vmatprep.subr.mxu0 0.0
    %638 = vmatpush2.msra.mxu0 %v57
    %639 = vmatprep.subr.mxu0 0.0
    %640 = vmatpush2.msra.mxu0 %v56
    %641 = vmatprep.subr.mxu0 0.0
    %642 = vmatpush2.msra.mxu0 %v55
    %643 = vmatprep.mubr.f32.mxu0 %v572
    %644 = vmatmul.mubr.f32.gmra.mxu0 %v571
    %v645 = vpop.f32.mrf.mxu0
    %v646 = vadd.f32 0.0, %v645
    %v647 = vpop.f32.mrf.mxu0
    %648 = vmatprep.mubr.f32.mxu0 %v574
    %649 = vmatmul.mubr.f32.gmra.mxu0 %v573
    %v650 = vpop.f32.mrf.mxu0
    %v651 = vadd.f32 0.0, %v650
    %v652 = vpop.f32.mrf.mxu0
    %653 = vmatprep.mubr.f32.mxu0 %v576
    %654 = vmatmul.mubr.f32.gmra.mxu0 %v575
    %v655 = vpop.f32.mrf.mxu0
    %v656 = vadd.f32 0.0, %v655
    %v657 = vpop.f32.mrf.mxu0
    %658 = vmatprep.mubr.f32.mxu0 %v578
    %659 = vmatmul.mubr.f32.gmra.mxu0 %v577
    %v660 = vpop.f32.mrf.mxu0
    %v661 = vadd.f32 0.0, %v660
    %v662 = vpop.f32.mrf.mxu0
    %663 = vdwg.mxu0
    %v664 = vsel %vm538, %v646, 0.0
    %665 = vadd.xlane.f32.xlu0 %v664
    %v666 = vpop.xlane.xlu0 %665
    %v667 = vsel %vm538, %v651, 0.0
    %668 = vadd.xlane.f32.xlu0 %v667
    %v669 = vpop.xlane.xlu0 %668
    %v670 = vsel %vm538, %v656, 0.0
    %671 = vadd.xlane.f32.xlu0 %v670
    %v672 = vpop.xlane.xlu0 %671
    %v673 = vsel %vm538, %v661, 0.0
    %674 = vadd.xlane.f32.xlu0 %v673
    %v675 = vpop.xlane.xlu0 %674
    %v676 = vmul.f32 %v666, 0.03125
    %v677 = vmul.f32 %v669, 0.03125
    %v678 = vmul.f32 %v672, 0.03125
    %v679 = vmul.f32 %v675, 0.03125
    %v680 = vadd.f32 %v676, 1e-05
    %v681 = vadd.f32 %v677, 1e-05
    %v682 = vadd.f32 %v678, 1e-05
    %v683 = vadd.f32 %v679, 1e-05
    %v684 = vrsqrt.pop %v680
    %v685 = vrsqrt.pop %v681
    %v686 = vrsqrt.pop %v682
    %v687 = vrsqrt.pop %v683
    %v688 = vmul.f32 %v72, %v684
    %v689 = vmul.f32 %v73, %v685
    %v690 = vmul.f32 %v74, %v686
    %v691 = vmul.f32 %v75, %v687
    %693 = vset.pattern.permute.xlu0 0
    %694 = vperm.xlu0 %693, %v688
    %v695 = vpop.permute.xlu0 %694
    %698 = vset.pattern.permute.xlu0 0
    %699 = vperm.xlu0 %698, %v689
    %v700 = vpop.permute.xlu0 %699
    %703 = vset.pattern.permute.xlu0 0
    %704 = vperm.xlu0 %703, %v690
    %v705 = vpop.permute.xlu0 %704
    %708 = vset.pattern.permute.xlu0 0
    %709 = vperm.xlu0 %708, %v691
    %v710 = vpop.permute.xlu0 %709
    %v712 = vmul.f32 %v563, %v695
    %v713 = vmul.f32 %v564, %v695
    %v714 = vmul.f32 %v565, %v700
    %v715 = vmul.f32 %v566, %v700
    %v716 = vmul.f32 %v567, %v705
    %v717 = vmul.f32 %v568, %v705
    %v718 = vmul.f32 %v569, %v710
    %v719 = vmul.f32 %v570, %v710
    %721 = vset.pattern.permute.xlu0 1
    %722 = vperm.xlu0 %721, %v72
    %v723 = vpop.permute.xlu0 %722
    %726 = vset.pattern.permute.xlu0 1
    %727 = vperm.xlu0 %726, %v73
    %v728 = vpop.permute.xlu0 %727
    %731 = vset.pattern.permute.xlu0 1
    %732 = vperm.xlu0 %731, %v74
    %v733 = vpop.permute.xlu0 %732
    %736 = vset.pattern.permute.xlu0 1
    %737 = vperm.xlu0 %736, %v75
    %v738 = vpop.permute.xlu0 %737
    %v740 = vadd.f32 %v712, %v723
    %v741 = vadd.f32 %v713, %v723
    %v742 = vadd.f32 %v714, %v728
    %v743 = vadd.f32 %v715, %v728
    %v744 = vadd.f32 %v716, %v733
    %v745 = vadd.f32 %v717, %v733
    %v746 = vadd.f32 %v718, %v738
    %v747 = vadd.f32 %v719, %v738
    %vm748 = vcmp.gt.f32.partialorder %v740, 20.0
    %vm749 = vcmp.gt.f32.partialorder %v741, 20.0
    %vm750 = vcmp.gt.f32.partialorder %v742, 20.0
    %vm751 = vcmp.gt.f32.partialorder %v743, 20.0
    %vm752 = vcmp.gt.f32.partialorder %v744, 20.0
    %vm753 = vcmp.gt.f32.partialorder %v745, 20.0
    %vm754 = vcmp.gt.f32.partialorder %v746, 20.0
    %vm755 = vcmp.gt.f32.partialorder %v747, 20.0
    %v756 = vmul.f32 %v740, 1.442695
    %v757 = vpow.pop %v756
    %v758 = vmul.f32 %v741, 1.442695
    %v759 = vpow.pop %v758
    %v760 = vmul.f32 %v742, 1.442695
    %v761 = vpow.pop %v760
    %v762 = vmul.f32 %v743, 1.442695
    %v763 = vpow.pop %v762
    %v764 = vmul.f32 %v744, 1.442695
    %v765 = vpow.pop %v764
    %v766 = vmul.f32 %v745, 1.442695
    %v767 = vpow.pop %v766
    %v768 = vmul.f32 %v746, 1.442695
    %v769 = vpow.pop %v768
    %v770 = vmul.f32 %v747, 1.442695
    %v771 = vpow.pop %v770
    %v772 = vadd.f32 %v757, 1.0
    %v773 = vlog2.pop %v772
    %v774 = vmul.f32 %v773, 0.6931472
    %v775 = vmul.f32 -0.5, %v757
    %v776 = vadd.f32 %v775, 1.0
    %v777 = vmul.f32 %v776, %v757
    %v778 = vand.u32 2147483647, %v757
    %vm779 = vcmp.lt.f32.partialorder %v778, 0.0004427343
    %v780 = vsel %vm779, %v777, %v774
    %v781 = vadd.f32 %v759, 1.0
    %v782 = vlog2.pop %v781
    %v783 = vmul.f32 %v782, 0.6931472
    %v784 = vmul.f32 -0.5, %v759
    %v785 = vadd.f32 %v784, 1.0
    %v786 = vmul.f32 %v785, %v759
    %v787 = vand.u32 2147483647, %v759
    %vm788 = vcmp.lt.f32.partialorder %v787, 0.0004427343
    %v789 = vsel %vm788, %v786, %v783
    %v790 = vadd.f32 %v761, 1.0
    %v791 = vlog2.pop %v790
    %v792 = vmul.f32 %v791, 0.6931472
    %v793 = vmul.f32 -0.5, %v761
    %v794 = vadd.f32 %v793, 1.0
    %v795 = vmul.f32 %v794, %v761
    %v796 = vand.u32 2147483647, %v761
    %vm797 = vcmp.lt.f32.partialorder %v796, 0.0004427343
    %v798 = vsel %vm797, %v795, %v792
    %v799 = vadd.f32 %v763, 1.0
    %v800 = vlog2.pop %v799
    %v801 = vmul.f32 %v800, 0.6931472
    %v802 = vmul.f32 -0.5, %v763
    %v803 = vadd.f32 %v802, 1.0
    %v804 = vmul.f32 %v803, %v763
    %v805 = vand.u32 2147483647, %v763
    %vm806 = vcmp.lt.f32.partialorder %v805, 0.0004427343
    %v807 = vsel %vm806, %v804, %v801
    %v808 = vadd.f32 %v765, 1.0
    %v809 = vlog2.pop %v808
    %v810 = vmul.f32 %v809, 0.6931472
    %v811 = vmul.f32 -0.5, %v765
    %v812 = vadd.f32 %v811, 1.0
    %v813 = vmul.f32 %v812, %v765
    %v814 = vand.u32 2147483647, %v765
    %vm815 = vcmp.lt.f32.partialorder %v814, 0.0004427343
    %v816 = vsel %vm815, %v813, %v810
    %v817 = vadd.f32 %v767, 1.0
    %v818 = vlog2.pop %v817
    %v819 = vmul.f32 %v818, 0.6931472
    %v820 = vmul.f32 -0.5, %v767
    %v821 = vadd.f32 %v820, 1.0
    %v822 = vmul.f32 %v821, %v767
    %v823 = vand.u32 2147483647, %v767
    %vm824 = vcmp.lt.f32.partialorder %v823, 0.0004427343
    %v825 = vsel %vm824, %v822, %v819
    %v826 = vadd.f32 %v769, 1.0
    %v827 = vlog2.pop %v826
    %v828 = vmul.f32 %v827, 0.6931472
    %v829 = vmul.f32 -0.5, %v769
    %v830 = vadd.f32 %v829, 1.0
    %v831 = vmul.f32 %v830, %v769
    %v832 = vand.u32 2147483647, %v769
    %vm833 = vcmp.lt.f32.partialorder %v832, 0.0004427343
    %v834 = vsel %vm833, %v831, %v828
    %v835 = vadd.f32 %v771, 1.0
    %v836 = vlog2.pop %v835
    %v837 = vmul.f32 %v836, 0.6931472
    %v838 = vmul.f32 -0.5, %v771
    %v839 = vadd.f32 %v838, 1.0
    %v840 = vmul.f32 %v839, %v771
    %v841 = vand.u32 2147483647, %v771
    %vm842 = vcmp.lt.f32.partialorder %v841, 0.0004427343
    %v843 = vsel %vm842, %v840, %v837
    %v844 = vsel %vm748, %v740, %v780
    %v845 = vsel %vm749, %v741, %v789
    %v846 = vsel %vm750, %v742, %v798
    %v847 = vsel %vm751, %v743, %v807
    %v848 = vsel %vm752, %v744, %v816
    %v849 = vsel %vm753, %v745, %v825
    %v850 = vsel %vm754, %v746, %v834
    %v851 = vsel %vm755, %v747, %v843
    %v852 = vmul.f32 %v844, %v438
    %v853 = vmul.f32 %v845, %v442
    %v854 = vmul.f32 %v846, %v438
    %v855 = vmul.f32 %v847, %v442
    %v856 = vmul.f32 %v848, %v438
    %v857 = vmul.f32 %v849, %v442
    %v858 = vmul.f32 %v850, %v438
    %v859 = vmul.f32 %v851, %v442
    %860 = vmatprep.subr.mxu0 0.0
    %861 = vmatpush1.msra.mxu0 %v54
    %862 = vmatprep.subr.mxu0 0.0
    %863 = vmatpush1.msra.mxu0 %v53
    %864 = vmatprep.subr.mxu0 0.0
    %865 = vmatpush1.msra.mxu0 %v52
    %866 = vmatprep.subr.mxu0 0.0
    %867 = vmatpush1.msra.mxu0 %v51
    %868 = vmatprep.subr.mxu0 0.0
    %869 = vmatpush1.msra.mxu0 %v50
    %870 = vmatprep.subr.mxu0 0.0
    %871 = vmatpush1.msra.mxu0 %v49
    %872 = vmatprep.subr.mxu0 0.0
    %873 = vmatpush1.msra.mxu0 %v48
    %874 = vmatprep.subr.mxu0 0.0
    %875 = vmatpush1.msra.mxu0 %v47
    %876 = vmatprep.subr.mxu0 0.0
    %877 = vmatpush1.msra.mxu0 %v46
    %878 = vmatprep.subr.mxu0 0.0
    %879 = vmatpush1.msra.mxu0 %v45
    %880 = vmatprep.subr.mxu0 0.0
    %881 = vmatpush1.msra.mxu0 %v44
    %882 = vmatprep.subr.mxu0 0.0
    %883 = vmatpush1.msra.mxu0 %v43
    %884 = vmatprep.subr.mxu0 0.0
    %885 = vmatpush1.msra.mxu0 %v42
    %886 = vmatprep.subr.mxu0 0.0
    %887 = vmatpush1.msra.mxu0 %v41
    %888 = vmatprep.subr.mxu0 0.0
    %889 = vmatpush1.msra.mxu0 %v40
    %890 = vmatprep.subr.mxu0 0.0
    %891 = vmatpush1.msra.mxu0 %v39
    %892 = vmatprep.subr.mxu0 0.0
    %893 = vmatpush2.msra.mxu0 %v70
    %894 = vmatprep.subr.mxu0 0.0
    %895 = vmatpush2.msra.mxu0 %v69
    %896 = vmatprep.subr.mxu0 0.0
    %897 = vmatpush2.msra.mxu0 %v68
    %898 = vmatprep.subr.mxu0 0.0
    %899 = vmatpush2.msra.mxu0 %v67
    %900 = vmatprep.subr.mxu0 0.0
    %901 = vmatpush2.msra.mxu0 %v66
    %902 = vmatprep.subr.mxu0 0.0
    %903 = vmatpush2.msra.mxu0 %v65
    %904 = vmatprep.subr.mxu0 0.0
    %905 = vmatpush2.msra.mxu0 %v64
    %906 = vmatprep.subr.mxu0 0.0
    %907 = vmatpush2.msra.mxu0 %v63
    %908 = vmatprep.subr.mxu0 0.0
    %909 = vmatpush2.msra.mxu0 %v62
    %910 = vmatprep.subr.mxu0 0.0
    %911 = vmatpush2.msra.mxu0 %v61
    %912 = vmatprep.subr.mxu0 0.0
    %913 = vmatpush2.msra.mxu0 %v60
    %914 = vmatprep.subr.mxu0 0.0
    %915 = vmatpush2.msra.mxu0 %v59
    %916 = vmatprep.subr.mxu0 0.0
    %917 = vmatpush2.msra.mxu0 %v58
    %918 = vmatprep.subr.mxu0 0.0
    %919 = vmatpush2.msra.mxu0 %v57
    %920 = vmatprep.subr.mxu0 0.0
    %921 = vmatpush2.msra.mxu0 %v56
    %922 = vmatprep.subr.mxu0 0.0
    %923 = vmatpush2.msra.mxu0 %v55
    %924 = vmatprep.mubr.f32.mxu0 %v853
    %925 = vmatmul.mubr.f32.gmra.mxu0 %v852
    %v926 = vpop.f32.mrf.mxu0
    %v927 = vadd.f32 0.0, %v926
    %v928 = vpop.f32.mrf.mxu0
    %929 = vmatprep.mubr.f32.mxu0 %v855
    %930 = vmatmul.mubr.f32.gmra.mxu0 %v854
    %v931 = vpop.f32.mrf.mxu0
    %v932 = vadd.f32 0.0, %v931
    %v933 = vpop.f32.mrf.mxu0
    %934 = vmatprep.mubr.f32.mxu0 %v857
    %935 = vmatmul.mubr.f32.gmra.mxu0 %v856
    %v936 = vpop.f32.mrf.mxu0
    %v937 = vadd.f32 0.0, %v936
    %v938 = vpop.f32.mrf.mxu0
    %939 = vmatprep.mubr.f32.mxu0 %v859
    %940 = vmatmul.mubr.f32.gmra.mxu0 %v858
    %v941 = vpop.f32.mrf.mxu0
    %v942 = vadd.f32 0.0, %v941
    %v943 = vpop.f32.mrf.mxu0
    %944 = vdwg.mxu0
    %v945 = vmul.f32 %v927, 0.0625
    %v946 = vmul.f32 %v932, 0.0625
    %v947 = vmul.f32 %v937, 0.0625
    %v948 = vmul.f32 %v942, 0.0625
    %v951 = vunpack.c.l.s4 1983009808
    %v952 = vunpack.c.0.s8 %v951
    %v953 = vlaneseq
    %v954 = vshrl.u32 %v953, 7
    %v955 = vsub.s32 %v952, %v954
    %v956 = vrot.slane %v71, %v955
    %v957 = vcombine.high %v956, %v956
    %v959 = vsel %vm538, %v945, 0
    %v962 = vsel %vm538, %v946, 0
    %v965 = vsel %vm538, %v947, 0
    %v968 = vsel %vm538, %v948, 0
    %vm970 = vcmask 1041408
    %v971 = vsel %vm970, %v956, 0
    %v973 = vsel %vm970, %v957, 0
    %975 = vmatprep.subr.mxu0 0.0
    %976 = vmatpush1.msra.mxu0 0.0
    %977 = vmatprep.subr.mxu0 0.0
    %978 = vmatpush1.msra.mxu0 0.0
    %979 = vmatprep.subr.mxu0 0.0
    %980 = vmatpush1.msra.mxu0 0.0
    %981 = vmatprep.subr.mxu0 0.0
    %982 = vmatpush1.msra.mxu0 0.0
    %983 = vmatprep.subr.mxu0 0.0
    %984 = vmatpush1.msra.mxu0 0.0
    %985 = vmatprep.subr.mxu0 0.0
    %986 = vmatpush1.msra.mxu0 0.0
    %987 = vmatprep.subr.mxu0 0.0
    %988 = vmatpush1.msra.mxu0 0.0
    %989 = vmatprep.subr.mxu0 0.0
    %990 = vmatpush1.msra.mxu0 0.0
    %991 = vmatprep.subr.mxu0 0.0
    %992 = vmatpush1.msra.mxu0 0.0
    %993 = vmatprep.subr.mxu0 0.0
    %994 = vmatpush1.msra.mxu0 0.0
    %995 = vmatprep.subr.mxu0 0.0
    %996 = vmatpush1.msra.mxu0 0.0
    %997 = vmatprep.subr.mxu0 0.0
    %998 = vmatpush1.msra.mxu0 0.0
    %999 = vmatprep.subr.mxu0 0.0
    %1000 = vmatpush1.msra.mxu0 0.0
    %1001 = vmatprep.subr.mxu0 0.0
    %1002 = vmatpush1.msra.mxu0 0.0
    %1003 = vmatprep.subr.mxu0 0.0
    %1004 = vmatpush1.msra.mxu0 0.0
    %1005 = vmatprep.subr.mxu0 %v973
    %1006 = vmatpush1.msra.mxu0 %v971
    %1007 = vmatprep.subr.mxu0 0.0
    %1008 = vmatpush2.msra.mxu0 0.0
    %1009 = vmatprep.subr.mxu0 0.0
    %1010 = vmatpush2.msra.mxu0 0.0
    %1011 = vmatprep.subr.mxu0 0.0
    %1012 = vmatpush2.msra.mxu0 0.0
    %1013 = vmatprep.subr.mxu0 0.0
    %1014 = vmatpush2.msra.mxu0 0.0
    %1015 = vmatprep.subr.mxu0 0.0
    %1016 = vmatpush2.msra.mxu0 0.0
    %1017 = vmatprep.subr.mxu0 0.0
    %1018 = vmatpush2.msra.mxu0 0.0
    %1019 = vmatprep.subr.mxu0 0.0
    %1020 = vmatpush2.msra.mxu0 0.0
    %1021 = vmatprep.subr.mxu0 0.0
    %1022 = vmatpush2.msra.mxu0 0.0
    %1023 = vmatprep.subr.mxu0 0.0
    %1024 = vmatpush2.msra.mxu0 0.0
    %1025 = vmatprep.subr.mxu0 0.0
    %1026 = vmatpush2.msra.mxu0 0.0
    %1027 = vmatprep.subr.mxu0 0.0
    %1028 = vmatpush2.msra.mxu0 0.0
    %1029 = vmatprep.subr.mxu0 0.0
    %1030 = vmatpush2.msra.mxu0 0.0
    %1031 = vmatprep.subr.mxu0 0.0
    %1032 = vmatpush2.msra.mxu0 0.0
    %1033 = vmatprep.subr.mxu0 0.0
    %1034 = vmatpush2.msra.mxu0 0.0
    %1035 = vmatprep.subr.mxu0 0.0
    %1036 = vmatpush2.msra.mxu0 0.0
    %1037 = vmatprep.subr.mxu0 0.0
    %1038 = vmatpush2.msra.mxu0 0.0
    %1039 = vmatprep.mubr.f32.mxu0 0.0
    %1040 = vmatmul.mubr.f32.gmra.mxu0 %v959
    %v1041 = vpop.f32.mrf.mxu0
    %v1042 = vadd.f32 1e-08, %v1041
    %v1043 = vpop.f32.mrf.mxu0
    %v1044 = vadd.f32 1e-08, %v1043
    %1045 = vmatprep.mubr.f32.mxu0 0.0
    %1046 = vmatmul.mubr.f32.gmra.mxu0 %v962
    %v1047 = vpop.f32.mrf.mxu0
    %v1048 = vadd.f32 1e-08, %v1047
    %v1049 = vpop.f32.mrf.mxu0
    %v1050 = vadd.f32 1e-08, %v1049
    %1051 = vmatprep.mubr.f32.mxu0 0.0
    %1052 = vmatmul.mubr.f32.gmra.mxu0 %v965
    %v1053 = vpop.f32.mrf.mxu0
    %v1054 = vadd.f32 1e-08, %v1053
    %v1055 = vpop.f32.mrf.mxu0
    %v1056 = vadd.f32 1e-08, %v1055
    %1057 = vmatprep.mubr.f32.mxu0 0.0
    %1058 = vmatmul.mubr.f32.gmra.mxu0 %v968
    %v1059 = vpop.f32.mrf.mxu0
    %v1060 = vadd.f32 1e-08, %v1059
    %v1061 = vpop.f32.mrf.mxu0
    %v1062 = vadd.f32 1e-08, %v1061
    %1063 = vdwg.mxu0
    %v1064 = vrcp.pop %v1042
    %v1065 = vrcp.pop %v1044
    %v1066 = vrcp.pop %v1048
    %v1067 = vrcp.pop %v1050
    %v1068 = vrcp.pop %v1054
    %v1069 = vrcp.pop %v1056
    %v1070 = vrcp.pop %v1060
    %v1071 = vrcp.pop %v1062
    %v1072 = vmul.f32 %v852, %v1064
    %v1073 = vmul.f32 %v853, %v1065
    %v1074 = vmul.f32 %v854, %v1066
    %v1075 = vmul.f32 %v855, %v1067
    %v1076 = vmul.f32 %v856, %v1068
    %v1077 = vmul.f32 %v857, %v1069
    %v1078 = vmul.f32 %v858, %v1070
    %v1079 = vmul.f32 %v859, %v1071
    %1080 = vst [vmem:[#allocation2 + $0x8] sm:$0xff] %v1072
    %1081 = vst [vmem:[#allocation2 + $0x10] sm:$0xff] %v1073
    %1082 = vst [vmem:[#allocation2 + $0x28] sm:$0xff] %v1074
    %1083 = vst [vmem:[#allocation2 + $0x30] sm:$0xff] %v1075
    %1084 = vst [vmem:[#allocation2 + $0x48] sm:$0xff] %v1076
    %1085 = vst [vmem:[#allocation2 + $0x50] sm:$0xff] %v1077
    %1086 = vst [vmem:[#allocation2 + $0x68] sm:$0xff] %v1078
    %1087 = vst [vmem:[#allocation2 + $0x70] sm:$0xff] %v1079
    %v1088 = vld [vmem:[%s6] sm:$0xff]
    %v1089 = vld [vmem:[%s6 + $0x8] sm:$0xff]
    %v1090 = vld [vmem:[#allocation2] sm:$0xff]
    %v1091 = vld [vmem:[#allocation2 + $0x8] sm:$0xff]
    %v1092 = vld [vmem:[#allocation2 + $0x10] sm:$0xff]
    %v1093 = vld [vmem:[#allocation2 + $0x20] sm:$0xff]
    %v1094 = vld [vmem:[#allocation2 + $0x28] sm:$0xff]
    %v1095 = vld [vmem:[#allocation2 + $0x30] sm:$0xff]
    %v1096 = vld [vmem:[#allocation2 + $0x40] sm:$0xff]
    %v1097 = vld [vmem:[#allocation2 + $0x48] sm:$0xff]
    %v1098 = vld [vmem:[#allocation2 + $0x50] sm:$0xff]
    %v1099 = vld [vmem:[#allocation2 + $0x60] sm:$0xff]
    %v1100 = vld [vmem:[#allocation2 + $0x68] sm:$0xff]
    %v1101 = vld [vmem:[#allocation2 + $0x70] sm:$0xff]
    %v1102 = vld [vmem:[%s6 + $0x10] sm:$0xff]
    %v1103 = vld [vmem:[%s6 + $0x18] sm:$0xff]
    %vm1104 = vcmask 261120
    %v1106 = vsel %vm1104, %v1102, 0
    %v1109 = vsel %vm1104, %v1103, 0
    %1111 = vmatprep.subr.mxu0 0.0
    %1112 = vmatpush1.msra.mxu0 0.0
    %1113 = vmatprep.subr.mxu0 0.0
    %1114 = vmatpush1.msra.mxu0 0.0
    %1115 = vmatprep.subr.mxu0 0.0
    %1116 = vmatpush1.msra.mxu0 0.0
    %1117 = vmatprep.subr.mxu0 0.0
    %1118 = vmatpush1.msra.mxu0 0.0
    %1119 = vmatprep.subr.mxu0 0.0
    %1120 = vmatpush1.msra.mxu0 0.0
    %1121 = vmatprep.subr.mxu0 0.0
    %1122 = vmatpush1.msra.mxu0 0.0
    %1123 = vmatprep.subr.mxu0 0.0
    %1124 = vmatpush1.msra.mxu0 0.0
    %1125 = vmatprep.subr.mxu0 0.0
    %1126 = vmatpush1.msra.mxu0 0.0
    %1127 = vmatprep.subr.mxu0 0.0
    %1128 = vmatpush1.msra.mxu0 0.0
    %1129 = vmatprep.subr.mxu0 0.0
    %1130 = vmatpush1.msra.mxu0 0.0
    %1131 = vmatprep.subr.mxu0 0.0
    %1132 = vmatpush1.msra.mxu0 0.0
    %1133 = vmatprep.subr.mxu0 0.0
    %1134 = vmatpush1.msra.mxu0 0.0
    %1135 = vmatprep.subr.mxu0 %v1101
    %1136 = vmatpush1.msra.mxu0 %v1100
    %1137 = vmatprep.subr.mxu0 %v1098
    %1138 = vmatpush1.msra.mxu0 %v1097
    %1139 = vmatprep.subr.mxu0 %v1095
    %1140 = vmatpush1.msra.mxu0 %v1094
    %1141 = vmatprep.subr.mxu0 %v1092
    %1142 = vmatpush1.msra.mxu0 %v1091
    %1143 = vmatprep.subr.mxu0 0.0
    %1144 = vmatpush2.msra.mxu0 0.0
    %1145 = vmatprep.subr.mxu0 0.0
    %1146 = vmatpush2.msra.mxu0 0.0
    %1147 = vmatprep.subr.mxu0 0.0
    %1148 = vmatpush2.msra.mxu0 0.0
    %1149 = vmatprep.subr.mxu0 0.0
    %1150 = vmatpush2.msra.mxu0 0.0
    %1151 = vmatprep.subr.mxu0 0.0
    %1152 = vmatpush2.msra.mxu0 0.0
    %1153 = vmatprep.subr.mxu0 0.0
    %1154 = vmatpush2.msra.mxu0 0.0
    %1155 = vmatprep.subr.mxu0 0.0
    %1156 = vmatpush2.msra.mxu0 0.0
    %1157 = vmatprep.subr.mxu0 0.0
    %1158 = vmatpush2.msra.mxu0 0.0
    %1159 = vmatprep.subr.mxu0 0.0
    %1160 = vmatpush2.msra.mxu0 0.0
    %1161 = vmatprep.subr.mxu0 0.0
    %1162 = vmatpush2.msra.mxu0 0.0
    %1163 = vmatprep.subr.mxu0 0.0
    %1164 = vmatpush2.msra.mxu0 0.0
    %1165 = vmatprep.subr.mxu0 0.0
    %1166 = vmatpush2.msra.mxu0 0.0
    %1167 = vmatprep.subr.mxu0 0.0
    %1168 = vmatpush2.msra.mxu0 0.0
    %1169 = vmatprep.subr.mxu0 0.0
    %1170 = vmatpush2.msra.mxu0 0.0
    %1171 = vmatprep.subr.mxu0 0.0
    %1172 = vmatpush2.msra.mxu0 0.0
    %1173 = vmatprep.subr.mxu0 0.0
    %1174 = vmatpush2.msra.mxu0 0.0
    %1175 = vmatprep.mubr.f32.mxu0 0.0
    %1176 = vmatmul.mubr.f32.gmra.mxu0 %v1106
    %v1177 = vpop.f32.mrf.mxu0
    %v1178 = vadd.f32 0.0, %v1177
    %v1179 = vpop.f32.mrf.mxu0
    %v1180 = vadd.f32 0.0, %v1179
    %1181 = vmatprep.mubr.f32.mxu0 0.0
    %1182 = vmatmul.mubr.f32.gmra.mxu0 %v1109
    %v1183 = vpop.f32.mrf.mxu0
    %v1184 = vadd.f32 0.0, %v1183
    %v1185 = vpop.f32.mrf.mxu0
    %v1186 = vadd.f32 0.0, %v1185
    %1187 = vdwg.mxu0
    %1200 = vrot.lane.b32.xlu0 %v1090, 1
    %v1201 = vpop.permute.xlu0 %1200
    %1202 = vrot.lane.b32.xlu0 %v1091, 1
    %v1203 = vpop.permute.xlu0 %1202
    %1204 = vrot.lane.b32.xlu0 %v1092, 1
    %v1205 = vpop.permute.xlu0 %1204
    %1206 = vrot.lane.b32.xlu0 %v1093, 1
    %v1207 = vpop.permute.xlu0 %1206
    %1208 = vrot.lane.b32.xlu0 %v1094, 1
    %v1209 = vpop.permute.xlu0 %1208
    %1210 = vrot.lane.b32.xlu0 %v1095, 1
    %v1211 = vpop.permute.xlu0 %1210
    %1212 = vrot.lane.b32.xlu0 %v1096, 1
    %v1213 = vpop.permute.xlu0 %1212
    %1214 = vrot.lane.b32.xlu0 %v1097, 1
    %v1215 = vpop.permute.xlu0 %1214
    %1216 = vrot.lane.b32.xlu0 %v1098, 1
    %v1217 = vpop.permute.xlu0 %1216
    %1218 = vrot.lane.b32.xlu0 %v1099, 1
    %v1219 = vpop.permute.xlu0 %1218
    %1220 = vrot.lane.b32.xlu0 %v1100, 1
    %v1221 = vpop.permute.xlu0 %1220
    %1222 = vrot.lane.b32.xlu0 %v1101, 1
    %v1223 = vpop.permute.xlu0 %1222
    %v1224 = vsel %vm198, %v1201, %v1203
    %v1225 = vsel %vm198, %v1203, %v1205
    %v1226 = vsel %vm198, %v1207, %v1209
    %v1227 = vsel %vm198, %v1209, %v1211
    %v1228 = vsel %vm198, %v1213, %v1215
    %v1229 = vsel %vm198, %v1215, %v1217
    %v1230 = vsel %vm198, %v1219, %v1221
    %v1231 = vsel %vm198, %v1221, %v1223
    %v1241 = vsel %vm1104, %v1088, 0
    %v1244 = vsel %vm1104, %v1089, 0
    %1246 = vmatprep.subr.mxu0 0.0
    %1247 = vmatpush1.msra.mxu0 0.0
    %1248 = vmatprep.subr.mxu0 0.0
    %1249 = vmatpush1.msra.mxu0 0.0
    %1250 = vmatprep.subr.mxu0 0.0
    %1251 = vmatpush1.msra.mxu0 0.0
    %1252 = vmatprep.subr.mxu0 0.0
    %1253 = vmatpush1.msra.mxu0 0.0
    %1254 = vmatprep.subr.mxu0 0.0
    %1255 = vmatpush1.msra.mxu0 0.0
    %1256 = vmatprep.subr.mxu0 0.0
    %1257 = vmatpush1.msra.mxu0 0.0
    %1258 = vmatprep.subr.mxu0 0.0
    %1259 = vmatpush1.msra.mxu0 0.0
    %1260 = vmatprep.subr.mxu0 0.0
    %1261 = vmatpush1.msra.mxu0 0.0
    %1262 = vmatprep.subr.mxu0 0.0
    %1263 = vmatpush1.msra.mxu0 0.0
    %1264 = vmatprep.subr.mxu0 0.0
    %1265 = vmatpush1.msra.mxu0 0.0
    %1266 = vmatprep.subr.mxu0 0.0
    %1267 = vmatpush1.msra.mxu0 0.0
    %1268 = vmatprep.subr.mxu0 0.0
    %1269 = vmatpush1.msra.mxu0 0.0
    %1270 = vmatprep.subr.mxu0 %v1231
    %1271 = vmatpush1.msra.mxu0 %v1230
    %1272 = vmatprep.subr.mxu0 %v1229
    %1273 = vmatpush1.msra.mxu0 %v1228
    %1274 = vmatprep.subr.mxu0 %v1227
    %1275 = vmatpush1.msra.mxu0 %v1226
    %1276 = vmatprep.subr.mxu0 %v1225
    %1277 = vmatpush1.msra.mxu0 %v1224
    %1278 = vmatprep.subr.mxu0 0.0
    %1279 = vmatpush2.msra.mxu0 0.0
    %1280 = vmatprep.subr.mxu0 0.0
    %1281 = vmatpush2.msra.mxu0 0.0
    %1282 = vmatprep.subr.mxu0 0.0
    %1283 = vmatpush2.msra.mxu0 0.0
    %1284 = vmatprep.subr.mxu0 0.0
    %1285 = vmatpush2.msra.mxu0 0.0
    %1286 = vmatprep.subr.mxu0 0.0
    %1287 = vmatpush2.msra.mxu0 0.0
    %1288 = vmatprep.subr.mxu0 0.0
    %1289 = vmatpush2.msra.mxu0 0.0
    %1290 = vmatprep.subr.mxu0 0.0
    %1291 = vmatpush2.msra.mxu0 0.0
    %1292 = vmatprep.subr.mxu0 0.0
    %1293 = vmatpush2.msra.mxu0 0.0
    %1294 = vmatprep.subr.mxu0 0.0
    %1295 = vmatpush2.msra.mxu0 0.0
    %1296 = vmatprep.subr.mxu0 0.0
    %1297 = vmatpush2.msra.mxu0 0.0
    %1298 = vmatprep.subr.mxu0 0.0
    %1299 = vmatpush2.msra.mxu0 0.0
    %1300 = vmatprep.subr.mxu0 0.0
    %1301 = vmatpush2.msra.mxu0 0.0
    %1302 = vmatprep.subr.mxu0 0.0
    %1303 = vmatpush2.msra.mxu0 0.0
    %1304 = vmatprep.subr.mxu0 0.0
    %1305 = vmatpush2.msra.mxu0 0.0
    %1306 = vmatprep.subr.mxu0 0.0
    %1307 = vmatpush2.msra.mxu0 0.0
    %1308 = vmatprep.subr.mxu0 0.0
    %1309 = vmatpush2.msra.mxu0 0.0
    %1310 = vmatprep.mubr.f32.mxu0 0.0
    %1311 = vmatmul.mubr.f32.gmra.mxu0 %v1241
    %v1312 = vpop.f32.mrf.mxu0
    %v1313 = vadd.f32 %v1178, %v1312
    %v1314 = vpop.f32.mrf.mxu0
    %v1315 = vadd.f32 %v1180, %v1314
    %1316 = vmatprep.mubr.f32.mxu0 0.0
    %1317 = vmatmul.mubr.f32.gmra.mxu0 %v1244
    %v1318 = vpop.f32.mrf.mxu0
    %v1319 = vadd.f32 %v1184, %v1318
    %v1320 = vpop.f32.mrf.mxu0
    %v1321 = vadd.f32 %v1186, %v1320
    %1322 = vdwg.mxu0
    %v1323 = vld [vmem:[%s6 + $0x20] sm:$0xff]
    %v1324 = vld [vmem:[%s6 + $0x28] sm:$0xff]
    %v1325 = vld [vmem:[#allocation2 + $0x8] sm:$0xff]
    %v1326 = vld [vmem:[#allocation2 + $0x10] sm:$0xff]
    %v1327 = vld [vmem:[#allocation2 + $0x18] sm:$0xff]
    %v1328 = vld [vmem:[#allocation2 + $0x28] sm:$0xff]
    %v1329 = vld [vmem:[#allocation2 + $0x30] sm:$0xff]
    %v1330 = vld [vmem:[#allocation2 + $0x38] sm:$0xff]
    %v1331 = vld [vmem:[#allocation2 + $0x48] sm:$0xff]
    %v1332 = vld [vmem:[#allocation2 + $0x50] sm:$0xff]
    %v1333 = vld [vmem:[#allocation2 + $0x58] sm:$0xff]
    %v1334 = vld [vmem:[#allocation2 + $0x68] sm:$0xff]
    %v1335 = vld [vmem:[#allocation2 + $0x70] sm:$0xff]
    %v1336 = vld [vmem:[#allocation2 + $0x78] sm:$0xff]
    %1349 = vrot.lane.b32.xlu0 %v1325, 127
    %v1350 = vpop.permute.xlu0 %1349
    %1351 = vrot.lane.b32.xlu0 %v1326, 127
    %v1352 = vpop.permute.xlu0 %1351
    %1353 = vrot.lane.b32.xlu0 %v1327, 127
    %v1354 = vpop.permute.xlu0 %1353
    %1355 = vrot.lane.b32.xlu0 %v1328, 127
    %v1356 = vpop.permute.xlu0 %1355
    %1357 = vrot.lane.b32.xlu0 %v1329, 127
    %v1358 = vpop.permute.xlu0 %1357
    %1359 = vrot.lane.b32.xlu0 %v1330, 127
    %v1360 = vpop.permute.xlu0 %1359
    %1361 = vrot.lane.b32.xlu0 %v1331, 127
    %v1362 = vpop.permute.xlu0 %1361
    %1363 = vrot.lane.b32.xlu0 %v1332, 127
    %v1364 = vpop.permute.xlu0 %1363
    %1365 = vrot.lane.b32.xlu0 %v1333, 127
    %v1366 = vpop.permute.xlu0 %1365
    %1367 = vrot.lane.b32.xlu0 %v1334, 127
    %v1368 = vpop.permute.xlu0 %1367
    %1369 = vrot.lane.b32.xlu0 %v1335, 127
    %v1370 = vpop.permute.xlu0 %1369
    %1371 = vrot.lane.b32.xlu0 %v1336, 127
    %v1372 = vpop.permute.xlu0 %1371
    %v1373 = vsel %vm320, %v1350, %v1352
    %v1374 = vsel %vm320, %v1352, %v1354
    %v1375 = vsel %vm320, %v1356, %v1358
    %v1376 = vsel %vm320, %v1358, %v1360
    %v1377 = vsel %vm320, %v1362, %v1364
    %v1378 = vsel %vm320, %v1364, %v1366
    %v1379 = vsel %vm320, %v1368, %v1370
    %v1380 = vsel %vm320, %v1370, %v1372
    %v1390 = vsel %vm1104, %v1323, 0
    %v1393 = vsel %vm1104, %v1324, 0
    %1395 = vmatprep.subr.mxu0 0.0
    %1396 = vmatpush1.msra.mxu0 0.0
    %1397 = vmatprep.subr.mxu0 0.0
    %1398 = vmatpush1.msra.mxu0 0.0
    %1399 = vmatprep.subr.mxu0 0.0
    %1400 = vmatpush1.msra.mxu0 0.0
    %1401 = vmatprep.subr.mxu0 0.0
    %1402 = vmatpush1.msra.mxu0 0.0
    %1403 = vmatprep.subr.mxu0 0.0
    %1404 = vmatpush1.msra.mxu0 0.0
    %1405 = vmatprep.subr.mxu0 0.0
    %1406 = vmatpush1.msra.mxu0 0.0
    %1407 = vmatprep.subr.mxu0 0.0
    %1408 = vmatpush1.msra.mxu0 0.0
    %1409 = vmatprep.subr.mxu0 0.0
    %1410 = vmatpush1.msra.mxu0 0.0
    %1411 = vmatprep.subr.mxu0 0.0
    %1412 = vmatpush1.msra.mxu0 0.0
    %1413 = vmatprep.subr.mxu0 0.0
    %1414 = vmatpush1.msra.mxu0 0.0
    %1415 = vmatprep.subr.mxu0 0.0
    %1416 = vmatpush1.msra.mxu0 0.0
    %1417 = vmatprep.subr.mxu0 0.0
    %1418 = vmatpush1.msra.mxu0 0.0
    %1419 = vmatprep.subr.mxu0 %v1380
    %1420 = vmatpush1.msra.mxu0 %v1379
    %1421 = vmatprep.subr.mxu0 %v1378
    %1422 = vmatpush1.msra.mxu0 %v1377
    %1423 = vmatprep.subr.mxu0 %v1376
    %1424 = vmatpush1.msra.mxu0 %v1375
    %1425 = vmatprep.subr.mxu0 %v1374
    %1426 = vmatpush1.msra.mxu0 %v1373
    %1427 = vmatprep.subr.mxu0 0.0
    %1428 = vmatpush2.msra.mxu0 0.0
    %1429 = vmatprep.subr.mxu0 0.0
    %1430 = vmatpush2.msra.mxu0 0.0
    %1431 = vmatprep.subr.mxu0 0.0
    %1432 = vmatpush2.msra.mxu0 0.0
    %1433 = vmatprep.subr.mxu0 0.0
    %1434 = vmatpush2.msra.mxu0 0.0
    %1435 = vmatprep.subr.mxu0 0.0
    %1436 = vmatpush2.msra.mxu0 0.0
    %1437 = vmatprep.subr.mxu0 0.0
    %1438 = vmatpush2.msra.mxu0 0.0
    %1439 = vmatprep.subr.mxu0 0.0
    %1440 = vmatpush2.msra.mxu0 0.0
    %1441 = vmatprep.subr.mxu0 0.0
    %1442 = vmatpush2.msra.mxu0 0.0
    %1443 = vmatprep.subr.mxu0 0.0
    %1444 = vmatpush2.msra.mxu0 0.0
    %1445 = vmatprep.subr.mxu0 0.0
    %1446 = vmatpush2.msra.mxu0 0.0
    %1447 = vmatprep.subr.mxu0 0.0
    %1448 = vmatpush2.msra.mxu0 0.0
    %1449 = vmatprep.subr.mxu0 0.0
    %1450 = vmatpush2.msra.mxu0 0.0
    %1451 = vmatprep.subr.mxu0 0.0
    %1452 = vmatpush2.msra.mxu0 0.0
    %1453 = vmatprep.subr.mxu0 0.0
    %1454 = vmatpush2.msra.mxu0 0.0
    %1455 = vmatprep.subr.mxu0 0.0
    %1456 = vmatpush2.msra.mxu0 0.0
    %1457 = vmatprep.subr.mxu0 0.0
    %1458 = vmatpush2.msra.mxu0 0.0
    %1459 = vmatprep.mubr.f32.mxu0 0.0
    %1460 = vmatmul.mubr.f32.gmra.mxu0 %v1390
    %v1461 = vpop.f32.mrf.mxu0
    %v1462 = vadd.f32 0.0, %v1461
    %v1463 = vpop.f32.mrf.mxu0
    %v1464 = vadd.f32 0.0, %v1463
    %1465 = vmatprep.mubr.f32.mxu0 0.0
    %1466 = vmatmul.mubr.f32.gmra.mxu0 %v1393
    %v1467 = vpop.f32.mrf.mxu0
    %v1468 = vadd.f32 0.0, %v1467
    %v1469 = vpop.f32.mrf.mxu0
    %v1470 = vadd.f32 0.0, %v1469
    %1471 = vdwg.mxu0
    %v1472 = vadd.f32 %v1313, %v1462
    %v1473 = vadd.f32 %v1315, %v1464
    %v1474 = vadd.f32 %v1319, %v1468
    %v1475 = vadd.f32 %v1321, %v1470
    %v1476 = vmul.f32 %v1472, %v438
    %v1477 = vmul.f32 %v1473, %v442
    %v1478 = vmul.f32 %v1474, %v438
    %v1479 = vmul.f32 %v1475, %v442
    %1480 = vmatprep.subr.mxu0 0.0
    %1481 = vmatpush1.msra.mxu0 %v54
    %1482 = vmatprep.subr.mxu0 0.0
    %1483 = vmatpush1.msra.mxu0 %v53
    %1484 = vmatprep.subr.mxu0 0.0
    %1485 = vmatpush1.msra.mxu0 %v52
    %1486 = vmatprep.subr.mxu0 0.0
    %1487 = vmatpush1.msra.mxu0 %v51
    %1488 = vmatprep.subr.mxu0 0.0
    %1489 = vmatpush1.msra.mxu0 %v50
    %1490 = vmatprep.subr.mxu0 0.0
    %1491 = vmatpush1.msra.mxu0 %v49
    %1492 = vmatprep.subr.mxu0 0.0
    %1493 = vmatpush1.msra.mxu0 %v48
    %1494 = vmatprep.subr.mxu0 0.0
    %1495 = vmatpush1.msra.mxu0 %v47
    %1496 = vmatprep.subr.mxu0 0.0
    %1497 = vmatpush1.msra.mxu0 %v46
    %1498 = vmatprep.subr.mxu0 0.0
    %1499 = vmatpush1.msra.mxu0 %v45
    %1500 = vmatprep.subr.mxu0 0.0
    %1501 = vmatpush1.msra.mxu0 %v44
    %1502 = vmatprep.subr.mxu0 0.0
    %1503 = vmatpush1.msra.mxu0 %v43
    %1504 = vmatprep.subr.mxu0 0.0
    %1505 = vmatpush1.msra.mxu0 %v42
    %1506 = vmatprep.subr.mxu0 0.0
    %1507 = vmatpush1.msra.mxu0 %v41
    %1508 = vmatprep.subr.mxu0 0.0
    %1509 = vmatpush1.msra.mxu0 %v40
    %1510 = vmatprep.subr.mxu0 0.0
    %1511 = vmatpush1.msra.mxu0 %v39
    %1512 = vmatprep.subr.mxu0 0.0
    %1513 = vmatpush2.msra.mxu0 %v70
    %1514 = vmatprep.subr.mxu0 0.0
    %1515 = vmatpush2.msra.mxu0 %v69
    %1516 = vmatprep.subr.mxu0 0.0
    %1517 = vmatpush2.msra.mxu0 %v68
    %1518 = vmatprep.subr.mxu0 0.0
    %1519 = vmatpush2.msra.mxu0 %v67
    %1520 = vmatprep.subr.mxu0 0.0
    %1521 = vmatpush2.msra.mxu0 %v66
    %1522 = vmatprep.subr.mxu0 0.0
    %1523 = vmatpush2.msra.mxu0 %v65
    %1524 = vmatprep.subr.mxu0 0.0
    %1525 = vmatpush2.msra.mxu0 %v64
    %1526 = vmatprep.subr.mxu0 0.0
    %1527 = vmatpush2.msra.mxu0 %v63
    %1528 = vmatprep.subr.mxu0 0.0
    %1529 = vmatpush2.msra.mxu0 %v62
    %1530 = vmatprep.subr.mxu0 0.0
    %1531 = vmatpush2.msra.mxu0 %v61
    %1532 = vmatprep.subr.mxu0 0.0
    %1533 = vmatpush2.msra.mxu0 %v60
    %1534 = vmatprep.subr.mxu0 0.0
    %1535 = vmatpush2.msra.mxu0 %v59
    %1536 = vmatprep.subr.mxu0 0.0
    %1537 = vmatpush2.msra.mxu0 %v58
    %1538 = vmatprep.subr.mxu0 0.0
    %1539 = vmatpush2.msra.mxu0 %v57
    %1540 = vmatprep.subr.mxu0 0.0
    %1541 = vmatpush2.msra.mxu0 %v56
    %1542 = vmatprep.subr.mxu0 0.0
    %1543 = vmatpush2.msra.mxu0 %v55
    %1544 = vmatprep.mubr.f32.mxu0 %v1477
    %1545 = vmatmul.mubr.f32.gmra.mxu0 %v1476
    %v1546 = vpop.f32.mrf.mxu0
    %v1547 = vadd.f32 0.0, %v1546
    %v1548 = vpop.f32.mrf.mxu0
    %1549 = vmatprep.mubr.f32.mxu0 %v1479
    %1550 = vmatmul.mubr.f32.gmra.mxu0 %v1478
    %v1551 = vpop.f32.mrf.mxu0
    %v1552 = vadd.f32 0.0, %v1551
    %v1553 = vpop.f32.mrf.mxu0
    %1554 = vdwg.mxu0
    %v1555 = vsel %vm538, %v1547, 0.0
    %1556 = vadd.xlane.f32.xlu0 %v1555
    %v1557 = vpop.xlane.xlu0 %1556
    %v1558 = vsel %vm538, %v1552, 0.0
    %1559 = vadd.xlane.f32.xlu0 %v1558
    %v1560 = vpop.xlane.xlu0 %1559
    %v1561 = vmul.f32 %v1557, 0.03125
    %v1562 = vmul.f32 %v1560, 0.03125
    %v1563 = vsub.f32 %v1476, %v1561
    %v1564 = vsub.f32 %v1477, %v1561
    %v1565 = vsub.f32 %v1478, %v1562
    %v1566 = vsub.f32 %v1479, %v1562
    %v1567 = vmul.f32 %v1563, %v438
    %v1568 = vmul.f32 %v1564, %v442
    %v1569 = vmul.f32 %v1565, %v438
    %v1570 = vmul.f32 %v1566, %v442
    %v1571 = vmul.f32 %v1567, %v1567
    %v1572 = vmul.f32 %v1568, %v1568
    %v1573 = vmul.f32 %v1569, %v1569
    %v1574 = vmul.f32 %v1570, %v1570
    %1575 = vmatprep.subr.mxu0 0.0
    %1576 = vmatpush1.msra.mxu0 %v54
    %1577 = vmatprep.subr.mxu0 0.0
    %1578 = vmatpush1.msra.mxu0 %v53
    %1579 = vmatprep.subr.mxu0 0.0
    %1580 = vmatpush1.msra.mxu0 %v52
    %1581 = vmatprep.subr.mxu0 0.0
    %1582 = vmatpush1.msra.mxu0 %v51
    %1583 = vmatprep.subr.mxu0 0.0
    %1584 = vmatpush1.msra.mxu0 %v50
    %1585 = vmatprep.subr.mxu0 0.0
    %1586 = vmatpush1.msra.mxu0 %v49
    %1587 = vmatprep.subr.mxu0 0.0
    %1588 = vmatpush1.msra.mxu0 %v48
    %1589 = vmatprep.subr.mxu0 0.0
    %1590 = vmatpush1.msra.mxu0 %v47
    %1591 = vmatprep.subr.mxu0 0.0
    %1592 = vmatpush1.msra.mxu0 %v46
    %1593 = vmatprep.subr.mxu0 0.0
    %1594 = vmatpush1.msra.mxu0 %v45
    %1595 = vmatprep.subr.mxu0 0.0
    %1596 = vmatpush1.msra.mxu0 %v44
    %1597 = vmatprep.subr.mxu0 0.0
    %1598 = vmatpush1.msra.mxu0 %v43
    %1599 = vmatprep.subr.mxu0 0.0
    %1600 = vmatpush1.msra.mxu0 %v42
    %1601 = vmatprep.subr.mxu0 0.0
    %1602 = vmatpush1.msra.mxu0 %v41
    %1603 = vmatprep.subr.mxu0 0.0
    %1604 = vmatpush1.msra.mxu0 %v40
    %1605 = vmatprep.subr.mxu0 0.0
    %1606 = vmatpush1.msra.mxu0 %v39
    %1607 = vmatprep.subr.mxu0 0.0
    %1608 = vmatpush2.msra.mxu0 %v70
    %1609 = vmatprep.subr.mxu0 0.0
    %1610 = vmatpush2.msra.mxu0 %v69
    %1611 = vmatprep.subr.mxu0 0.0
    %1612 = vmatpush2.msra.mxu0 %v68
    %1613 = vmatprep.subr.mxu0 0.0
    %1614 = vmatpush2.msra.mxu0 %v67
    %1615 = vmatprep.subr.mxu0 0.0
    %1616 = vmatpush2.msra.mxu0 %v66
    %1617 = vmatprep.subr.mxu0 0.0
    %1618 = vmatpush2.msra.mxu0 %v65
    %1619 = vmatprep.subr.mxu0 0.0
    %1620 = vmatpush2.msra.mxu0 %v64
    %1621 = vmatprep.subr.mxu0 0.0
    %1622 = vmatpush2.msra.mxu0 %v63
    %1623 = vmatprep.subr.mxu0 0.0
    %1624 = vmatpush2.msra.mxu0 %v62
    %1625 = vmatprep.subr.mxu0 0.0
    %1626 = vmatpush2.msra.mxu0 %v61
    %1627 = vmatprep.subr.mxu0 0.0
    %1628 = vmatpush2.msra.mxu0 %v60
    %1629 = vmatprep.subr.mxu0 0.0
    %1630 = vmatpush2.msra.mxu0 %v59
    %1631 = vmatprep.subr.mxu0 0.0
    %1632 = vmatpush2.msra.mxu0 %v58
    %1633 = vmatprep.subr.mxu0 0.0
    %1634 = vmatpush2.msra.mxu0 %v57
    %1635 = vmatprep.subr.mxu0 0.0
    %1636 = vmatpush2.msra.mxu0 %v56
    %1637 = vmatprep.subr.mxu0 0.0
    %1638 = vmatpush2.msra.mxu0 %v55
    %1639 = vmatprep.mubr.f32.mxu0 %v1572
    %1640 = vmatmul.mubr.f32.gmra.mxu0 %v1571
    %v1641 = vpop.f32.mrf.mxu0
    %v1642 = vadd.f32 0.0, %v1641
    %v1643 = vpop.f32.mrf.mxu0
    %1644 = vmatprep.mubr.f32.mxu0 %v1574
    %1645 = vmatmul.mubr.f32.gmra.mxu0 %v1573
    %v1646 = vpop.f32.mrf.mxu0
    %v1647 = vadd.f32 0.0, %v1646
    %v1648 = vpop.f32.mrf.mxu0
    %1649 = vdwg.mxu0
    %v1650 = vsel %vm538, %v1642, 0.0
    %1651 = vadd.xlane.f32.xlu0 %v1650
    %v1652 = vpop.xlane.xlu0 %1651
    %v1653 = vsel %vm538, %v1647, 0.0
    %1654 = vadd.xlane.f32.xlu0 %v1653
    %v1655 = vpop.xlane.xlu0 %1654
    %v1656 = vmul.f32 %v1652, 0.03125
    %v1657 = vmul.f32 %v1655, 0.03125
    %v1658 = vadd.f32 %v1656, 1e-05
    %v1659 = vadd.f32 %v1657, 1e-05
    %v1660 = vrsqrt.pop %v1658
    %v1661 = vrsqrt.pop %v1659
    %v1662 = vmul.f32 %v72, %v1660
    %v1663 = vmul.f32 %v73, %v1661
    %1665 = vset.pattern.permute.xlu0 2
    %1666 = vperm.xlu0 %1665, %v1662
    %v1667 = vpop.permute.xlu0 %1666
    %1670 = vset.pattern.permute.xlu0 2
    %1671 = vperm.xlu0 %1670, %v1663
    %v1672 = vpop.permute.xlu0 %1671
    %v1674 = vmul.f32 %v1567, %v1667
    %v1675 = vmul.f32 %v1568, %v1667
    %v1676 = vmul.f32 %v1569, %v1672
    %v1677 = vmul.f32 %v1570, %v1672
    %1678 = vset.pattern.permute.xlu0 3
    %1679 = vperm.xlu0 %1678, %v72
    %v1680 = vpop.permute.xlu0 %1679
    %1682 = vset.pattern.permute.xlu0 3
    %1683 = vperm.xlu0 %1682, %v73
    %v1684 = vpop.permute.xlu0 %1683
    %v1686 = vadd.f32 %v1674, %v1680
    %v1687 = vadd.f32 %v1675, %v1680
    %v1688 = vadd.f32 %v1676, %v1684
    %v1689 = vadd.f32 %v1677, %v1684
    %vm1690 = vcmp.gt.f32.partialorder %v1686, 20.0
    %vm1691 = vcmp.gt.f32.partialorder %v1687, 20.0
    %vm1692 = vcmp.gt.f32.partialorder %v1688, 20.0
    %vm1693 = vcmp.gt.f32.partialorder %v1689, 20.0
    %v1694 = vmul.f32 %v1686, 1.442695
    %v1695 = vpow.pop %v1694
    %v1696 = vmul.f32 %v1687, 1.442695
    %v1697 = vpow.pop %v1696
    %v1698 = vmul.f32 %v1688, 1.442695
    %v1699 = vpow.pop %v1698
    %v1700 = vmul.f32 %v1689, 1.442695
    %v1701 = vpow.pop %v1700
    %v1702 = vadd.f32 %v1695, 1.0
    %v1703 = vlog2.pop %v1702
    %v1704 = vmul.f32 %v1703, 0.6931472
    %v1705 = vmul.f32 -0.5, %v1695
    %v1706 = vadd.f32 %v1705, 1.0
    %v1707 = vmul.f32 %v1706, %v1695
    %v1708 = vand.u32 2147483647, %v1695
    %vm1709 = vcmp.lt.f32.partialorder %v1708, 0.0004427343
    %v1710 = vsel %vm1709, %v1707, %v1704
    %v1711 = vadd.f32 %v1697, 1.0
    %v1712 = vlog2.pop %v1711
    %v1713 = vmul.f32 %v1712, 0.6931472
    %v1714 = vmul.f32 -0.5, %v1697
    %v1715 = vadd.f32 %v1714, 1.0
    %v1716 = vmul.f32 %v1715, %v1697
    %v1717 = vand.u32 2147483647, %v1697
    %vm1718 = vcmp.lt.f32.partialorder %v1717, 0.0004427343
    %v1719 = vsel %vm1718, %v1716, %v1713
    %v1720 = vadd.f32 %v1699, 1.0
    %v1721 = vlog2.pop %v1720
    %v1722 = vmul.f32 %v1721, 0.6931472
    %v1723 = vmul.f32 -0.5, %v1699
    %v1724 = vadd.f32 %v1723, 1.0
    %v1725 = vmul.f32 %v1724, %v1699
    %v1726 = vand.u32 2147483647, %v1699
    %vm1727 = vcmp.lt.f32.partialorder %v1726, 0.0004427343
    %v1728 = vsel %vm1727, %v1725, %v1722
    %v1729 = vadd.f32 %v1701, 1.0
    %v1730 = vlog2.pop %v1729
    %v1731 = vmul.f32 %v1730, 0.6931472
    %v1732 = vmul.f32 -0.5, %v1701
    %v1733 = vadd.f32 %v1732, 1.0
    %v1734 = vmul.f32 %v1733, %v1701
    %v1735 = vand.u32 2147483647, %v1701
    %vm1736 = vcmp.lt.f32.partialorder %v1735, 0.0004427343
    %v1737 = vsel %vm1736, %v1734, %v1731
    %v1738 = vsel %vm1690, %v1686, %v1710
    %v1739 = vsel %vm1691, %v1687, %v1719
    %v1740 = vsel %vm1692, %v1688, %v1728
    %v1741 = vsel %vm1693, %v1689, %v1737
    %v1742 = vmul.f32 %v1738, %v438
    %v1743 = vmul.f32 %v1739, %v442
    %v1744 = vmul.f32 %v1740, %v438
    %v1745 = vmul.f32 %v1741, %v442
    %1746 = vmatprep.subr.mxu0 0.0
    %1747 = vmatpush1.msra.mxu0 %v54
    %1748 = vmatprep.subr.mxu0 0.0
    %1749 = vmatpush1.msra.mxu0 %v53
    %1750 = vmatprep.subr.mxu0 0.0
    %1751 = vmatpush1.msra.mxu0 %v52
    %1752 = vmatprep.subr.mxu0 0.0
    %1753 = vmatpush1.msra.mxu0 %v51
    %1754 = vmatprep.subr.mxu0 0.0
    %1755 = vmatpush1.msra.mxu0 %v50
    %1756 = vmatprep.subr.mxu0 0.0
    %1757 = vmatpush1.msra.mxu0 %v49
    %1758 = vmatprep.subr.mxu0 0.0
    %1759 = vmatpush1.msra.mxu0 %v48
    %1760 = vmatprep.subr.mxu0 0.0
    %1761 = vmatpush1.msra.mxu0 %v47
    %1762 = vmatprep.subr.mxu0 0.0
    %1763 = vmatpush1.msra.mxu0 %v46
    %1764 = vmatprep.subr.mxu0 0.0
    %1765 = vmatpush1.msra.mxu0 %v45
    %1766 = vmatprep.subr.mxu0 0.0
    %1767 = vmatpush1.msra.mxu0 %v44
    %1768 = vmatprep.subr.mxu0 0.0
    %1769 = vmatpush1.msra.mxu0 %v43
    %1770 = vmatprep.subr.mxu0 0.0
    %1771 = vmatpush1.msra.mxu0 %v42
    %1772 = vmatprep.subr.mxu0 0.0
    %1773 = vmatpush1.msra.mxu0 %v41
    %1774 = vmatprep.subr.mxu0 0.0
    %1775 = vmatpush1.msra.mxu0 %v40
    %1776 = vmatprep.subr.mxu0 0.0
    %1777 = vmatpush1.msra.mxu0 %v39
    %1778 = vmatprep.subr.mxu0 0.0
    %1779 = vmatpush2.msra.mxu0 %v70
    %1780 = vmatprep.subr.mxu0 0.0
    %1781 = vmatpush2.msra.mxu0 %v69
    %1782 = vmatprep.subr.mxu0 0.0
    %1783 = vmatpush2.msra.mxu0 %v68
    %1784 = vmatprep.subr.mxu0 0.0
    %1785 = vmatpush2.msra.mxu0 %v67
    %1786 = vmatprep.subr.mxu0 0.0
    %1787 = vmatpush2.msra.mxu0 %v66
    %1788 = vmatprep.subr.mxu0 0.0
    %1789 = vmatpush2.msra.mxu0 %v65
    %1790 = vmatprep.subr.mxu0 0.0
    %1791 = vmatpush2.msra.mxu0 %v64
    %1792 = vmatprep.subr.mxu0 0.0
    %1793 = vmatpush2.msra.mxu0 %v63
    %1794 = vmatprep.subr.mxu0 0.0
    %1795 = vmatpush2.msra.mxu0 %v62
    %1796 = vmatprep.subr.mxu0 0.0
    %1797 = vmatpush2.msra.mxu0 %v61
    %1798 = vmatprep.subr.mxu0 0.0
    %1799 = vmatpush2.msra.mxu0 %v60
    %1800 = vmatprep.subr.mxu0 0.0
    %1801 = vmatpush2.msra.mxu0 %v59
    %1802 = vmatprep.subr.mxu0 0.0
    %1803 = vmatpush2.msra.mxu0 %v58
    %1804 = vmatprep.subr.mxu0 0.0
    %1805 = vmatpush2.msra.mxu0 %v57
    %1806 = vmatprep.subr.mxu0 0.0
    %1807 = vmatpush2.msra.mxu0 %v56
    %1808 = vmatprep.subr.mxu0 0.0
    %1809 = vmatpush2.msra.mxu0 %v55
    %1810 = vmatprep.mubr.f32.mxu0 %v1743
    %1811 = vmatmul.mubr.f32.gmra.mxu0 %v1742
    %v1812 = vpop.f32.mrf.mxu0
    %v1813 = vadd.f32 0.0, %v1812
    %v1814 = vpop.f32.mrf.mxu0
    %1815 = vmatprep.mubr.f32.mxu0 %v1745
    %1816 = vmatmul.mubr.f32.gmra.mxu0 %v1744
    %v1817 = vpop.f32.mrf.mxu0
    %v1818 = vadd.f32 0.0, %v1817
    %v1819 = vpop.f32.mrf.mxu0
    %1820 = vdwg.mxu0
    %v1821 = vmul.f32 %v1813, 0.0625
    %v1822 = vmul.f32 %v1818, 0.0625
    %v1824 = vsel %vm538, %v1821, 0
    %v1827 = vsel %vm538, %v1822, 0
    %1829 = vmatprep.subr.mxu0 0.0
    %1830 = vmatpush1.msra.mxu0 0.0
    %1831 = vmatprep.subr.mxu0 0.0
    %1832 = vmatpush1.msra.mxu0 0.0
    %1833 = vmatprep.subr.mxu0 0.0
    %1834 = vmatpush1.msra.mxu0 0.0
    %1835 = vmatprep.subr.mxu0 0.0
    %1836 = vmatpush1.msra.mxu0 0.0
    %1837 = vmatprep.subr.mxu0 0.0
    %1838 = vmatpush1.msra.mxu0 0.0
    %1839 = vmatprep.subr.mxu0 0.0
    %1840 = vmatpush1.msra.mxu0 0.0
    %1841 = vmatprep.subr.mxu0 0.0
    %1842 = vmatpush1.msra.mxu0 0.0
    %1843 = vmatprep.subr.mxu0 0.0
    %1844 = vmatpush1.msra.mxu0 0.0
    %1845 = vmatprep.subr.mxu0 0.0
    %1846 = vmatpush1.msra.mxu0 0.0
    %1847 = vmatprep.subr.mxu0 0.0
    %1848 = vmatpush1.msra.mxu0 0.0
    %1849 = vmatprep.subr.mxu0 0.0
    %1850 = vmatpush1.msra.mxu0 0.0
    %1851 = vmatprep.subr.mxu0 0.0
    %1852 = vmatpush1.msra.mxu0 0.0
    %1853 = vmatprep.subr.mxu0 0.0
    %1854 = vmatpush1.msra.mxu0 0.0
    %1855 = vmatprep.subr.mxu0 0.0
    %1856 = vmatpush1.msra.mxu0 0.0
    %1857 = vmatprep.subr.mxu0 0.0
    %1858 = vmatpush1.msra.mxu0 0.0
    %1859 = vmatprep.subr.mxu0 %v973
    %1860 = vmatpush1.msra.mxu0 %v971
    %1861 = vmatprep.subr.mxu0 0.0
    %1862 = vmatpush2.msra.mxu0 0.0
    %1863 = vmatprep.subr.mxu0 0.0
    %1864 = vmatpush2.msra.mxu0 0.0
    %1865 = vmatprep.subr.mxu0 0.0
    %1866 = vmatpush2.msra.mxu0 0.0
    %1867 = vmatprep.subr.mxu0 0.0
    %1868 = vmatpush2.msra.mxu0 0.0
    %1869 = vmatprep.subr.mxu0 0.0
    %1870 = vmatpush2.msra.mxu0 0.0
    %1871 = vmatprep.subr.mxu0 0.0
    %1872 = vmatpush2.msra.mxu0 0.0
    %1873 = vmatprep.subr.mxu0 0.0
    %1874 = vmatpush2.msra.mxu0 0.0
    %1875 = vmatprep.subr.mxu0 0.0
    %1876 = vmatpush2.msra.mxu0 0.0
    %1877 = vmatprep.subr.mxu0 0.0
    %1878 = vmatpush2.msra.mxu0 0.0
    %1879 = vmatprep.subr.mxu0 0.0
    %1880 = vmatpush2.msra.mxu0 0.0
    %1881 = vmatprep.subr.mxu0 0.0
    %1882 = vmatpush2.msra.mxu0 0.0
    %1883 = vmatprep.subr.mxu0 0.0
    %1884 = vmatpush2.msra.mxu0 0.0
    %1885 = vmatprep.subr.mxu0 0.0
    %1886 = vmatpush2.msra.mxu0 0.0
    %1887 = vmatprep.subr.mxu0 0.0
    %1888 = vmatpush2.msra.mxu0 0.0
    %1889 = vmatprep.subr.mxu0 0.0
    %1890 = vmatpush2.msra.mxu0 0.0
    %1891 = vmatprep.subr.mxu0 0.0
    %1892 = vmatpush2.msra.mxu0 0.0
    %1893 = vmatprep.mubr.f32.mxu0 0.0
    %1894 = vmatmul.mubr.f32.gmra.mxu0 %v1824
    %v1895 = vpop.f32.mrf.mxu0
    %v1896 = vadd.f32 1e-08, %v1895
    %v1897 = vpop.f32.mrf.mxu0
    %v1898 = vadd.f32 1e-08, %v1897
    %1899 = vmatprep.mubr.f32.mxu0 0.0
    %1900 = vmatmul.mubr.f32.gmra.mxu0 %v1827
    %v1901 = vpop.f32.mrf.mxu0
    %v1902 = vadd.f32 1e-08, %v1901
    %v1903 = vpop.f32.mrf.mxu0
    %v1904 = vadd.f32 1e-08, %v1903
    %1905 = vdwg.mxu0
    %v1906 = vrcp.pop %v1896
    %v1907 = vrcp.pop %v1898
    %v1908 = vrcp.pop %v1902
    %v1909 = vrcp.pop %v1904
    %v1910 = vmul.f32 %v1742, %v1906
    %v1911 = vmul.f32 %v1743, %v1907
    %v1912 = vmul.f32 %v1744, %v1908
    %v1913 = vmul.f32 %v1745, %v1909
    %1914 = vst [vmem:[#allocation2 + $0x8] sm:$0xff] %v1910
    %1915 = vst [vmem:[#allocation2 + $0x10] sm:$0xff] %v1911
    %1916 = vst [vmem:[#allocation2 + $0x28] sm:$0xff] %v1912
    %1917 = vst [vmem:[#allocation2 + $0x30] sm:$0xff] %v1913
    %v1918 = vld [vmem:[%s7] sm:$0xff]
    %v1919 = vld [vmem:[#allocation2] sm:$0xff]
    %v1920 = vld [vmem:[#allocation2 + $0x8] sm:$0xff]
    %v1921 = vld [vmem:[#allocation2 + $0x10] sm:$0xff]
    %v1922 = vld [vmem:[#allocation2 + $0x20] sm:$0xff]
    %v1923 = vld [vmem:[#allocation2 + $0x28] sm:$0xff]
    %v1924 = vld [vmem:[#allocation2 + $0x30] sm:$0xff]
    %v1925 = vld [vmem:[%s7 + $0x8] sm:$0xff]
    %vm1926 = vcmask 130048
    %v1928 = vsel %vm1926, %v1925, 0
    %1930 = vmatprep.subr.mxu0 0.0
    %1931 = vmatpush1.msra.mxu0 0.0
    %1932 = vmatprep.subr.mxu0 0.0
    %1933 = vmatpush1.msra.mxu0 0.0
    %1934 = vmatprep.subr.mxu0 0.0
    %1935 = vmatpush1.msra.mxu0 0.0
    %1936 = vmatprep.subr.mxu0 0.0
    %1937 = vmatpush1.msra.mxu0 0.0
    %1938 = vmatprep.subr.mxu0 0.0
    %1939 = vmatpush1.msra.mxu0 0.0
    %1940 = vmatprep.subr.mxu0 0.0
    %1941 = vmatpush1.msra.mxu0 0.0
    %1942 = vmatprep.subr.mxu0 0.0
    %1943 = vmatpush1.msra.mxu0 0.0
    %1944 = vmatprep.subr.mxu0 0.0
    %1945 = vmatpush1.msra.mxu0 0.0
    %1946 = vmatprep.subr.mxu0 0.0
    %1947 = vmatpush1.msra.mxu0 0.0
    %1948 = vmatprep.subr.mxu0 0.0
    %1949 = vmatpush1.msra.mxu0 0.0
    %1950 = vmatprep.subr.mxu0 0.0
    %1951 = vmatpush1.msra.mxu0 0.0
    %1952 = vmatprep.subr.mxu0 0.0
    %1953 = vmatpush1.msra.mxu0 0.0
    %1954 = vmatprep.subr.mxu0 0.0
    %1955 = vmatpush1.msra.mxu0 0.0
    %1956 = vmatprep.subr.mxu0 0.0
    %1957 = vmatpush1.msra.mxu0 0.0
    %1958 = vmatprep.subr.mxu0 %v1924
    %1959 = vmatpush1.msra.mxu0 %v1923
    %1960 = vmatprep.subr.mxu0 %v1921
    %1961 = vmatpush1.msra.mxu0 %v1920
    %1962 = vmatprep.subr.mxu0 0.0
    %1963 = vmatpush2.msra.mxu0 0.0
    %1964 = vmatprep.subr.mxu0 0.0
    %1965 = vmatpush2.msra.mxu0 0.0
    %1966 = vmatprep.subr.mxu0 0.0
    %1967 = vmatpush2.msra.mxu0 0.0
    %1968 = vmatprep.subr.mxu0 0.0
    %1969 = vmatpush2.msra.mxu0 0.0
    %1970 = vmatprep.subr.mxu0 0.0
    %1971 = vmatpush2.msra.mxu0 0.0
    %1972 = vmatprep.subr.mxu0 0.0
    %1973 = vmatpush2.msra.mxu0 0.0
    %1974 = vmatprep.subr.mxu0 0.0
    %1975 = vmatpush2.msra.mxu0 0.0
    %1976 = vmatprep.subr.mxu0 0.0
    %1977 = vmatpush2.msra.mxu0 0.0
    %1978 = vmatprep.subr.mxu0 0.0
    %1979 = vmatpush2.msra.mxu0 0.0
    %1980 = vmatprep.subr.mxu0 0.0
    %1981 = vmatpush2.msra.mxu0 0.0
    %1982 = vmatprep.subr.mxu0 0.0
    %1983 = vmatpush2.msra.mxu0 0.0
    %1984 = vmatprep.subr.mxu0 0.0
    %1985 = vmatpush2.msra.mxu0 0.0
    %1986 = vmatprep.subr.mxu0 0.0
    %1987 = vmatpush2.msra.mxu0 0.0
    %1988 = vmatprep.subr.mxu0 0.0
    %1989 = vmatpush2.msra.mxu0 0.0
    %1990 = vmatprep.subr.mxu0 0.0
    %1991 = vmatpush2.msra.mxu0 0.0
    %1992 = vmatprep.subr.mxu0 0.0
    %1993 = vmatpush2.msra.mxu0 0.0
    %1994 = vmatprep.mubr.f32.mxu0 0.0
    %1995 = vmatmul.mubr.f32.gmra.mxu0 %v1928
    %v1996 = vpop.f32.mrf.mxu0
    %v1997 = vadd.f32 0.0, %v1996
    %v1998 = vpop.f32.mrf.mxu0
    %v1999 = vadd.f32 0.0, %v1998
    %2000 = vdwg.mxu0
    %2007 = vrot.lane.b32.xlu0 %v1919, 1
    %v2008 = vpop.permute.xlu0 %2007
    %2009 = vrot.lane.b32.xlu0 %v1920, 1
    %v2010 = vpop.permute.xlu0 %2009
    %2011 = vrot.lane.b32.xlu0 %v1921, 1
    %v2012 = vpop.permute.xlu0 %2011
    %2013 = vrot.lane.b32.xlu0 %v1922, 1
    %v2014 = vpop.permute.xlu0 %2013
    %2015 = vrot.lane.b32.xlu0 %v1923, 1
    %v2016 = vpop.permute.xlu0 %2015
    %2017 = vrot.lane.b32.xlu0 %v1924, 1
    %v2018 = vpop.permute.xlu0 %2017
    %v2019 = vsel %vm198, %v2008, %v2010
    %v2020 = vsel %vm198, %v2010, %v2012
    %v2021 = vsel %vm198, %v2014, %v2016
    %v2022 = vsel %vm198, %v2016, %v2018
    %v2028 = vsel %vm1926, %v1918, 0
    %2030 = vmatprep.subr.mxu0 0.0
    %2031 = vmatpush1.msra.mxu0 0.0
    %2032 = vmatprep.subr.mxu0 0.0
    %2033 = vmatpush1.msra.mxu0 0.0
    %2034 = vmatprep.subr.mxu0 0.0
    %2035 = vmatpush1.msra.mxu0 0.0
    %2036 = vmatprep.subr.mxu0 0.0
    %2037 = vmatpush1.msra.mxu0 0.0
    %2038 = vmatprep.subr.mxu0 0.0
    %2039 = vmatpush1.msra.mxu0 0.0
    %2040 = vmatprep.subr.mxu0 0.0
    %2041 = vmatpush1.msra.mxu0 0.0
    %2042 = vmatprep.subr.mxu0 0.0
    %2043 = vmatpush1.msra.mxu0 0.0
    %2044 = vmatprep.subr.mxu0 0.0
    %2045 = vmatpush1.msra.mxu0 0.0
    %2046 = vmatprep.subr.mxu0 0.0
    %2047 = vmatpush1.msra.mxu0 0.0
    %2048 = vmatprep.subr.mxu0 0.0
    %2049 = vmatpush1.msra.mxu0 0.0
    %2050 = vmatprep.subr.mxu0 0.0
    %2051 = vmatpush1.msra.mxu0 0.0
    %2052 = vmatprep.subr.mxu0 0.0
    %2053 = vmatpush1.msra.mxu0 0.0
    %2054 = vmatprep.subr.mxu0 0.0
    %2055 = vmatpush1.msra.mxu0 0.0
    %2056 = vmatprep.subr.mxu0 0.0
    %2057 = vmatpush1.msra.mxu0 0.0
    %2058 = vmatprep.subr.mxu0 %v2022
    %2059 = vmatpush1.msra.mxu0 %v2021
    %2060 = vmatprep.subr.mxu0 %v2020
    %2061 = vmatpush1.msra.mxu0 %v2019
    %2062 = vmatprep.subr.mxu0 0.0
    %2063 = vmatpush2.msra.mxu0 0.0
    %2064 = vmatprep.subr.mxu0 0.0
    %2065 = vmatpush2.msra.mxu0 0.0
    %2066 = vmatprep.subr.mxu0 0.0
    %2067 = vmatpush2.msra.mxu0 0.0
    %2068 = vmatprep.subr.mxu0 0.0
    %2069 = vmatpush2.msra.mxu0 0.0
    %2070 = vmatprep.subr.mxu0 0.0
    %2071 = vmatpush2.msra.mxu0 0.0
    %2072 = vmatprep.subr.mxu0 0.0
    %2073 = vmatpush2.msra.mxu0 0.0
    %2074 = vmatprep.subr.mxu0 0.0
    %2075 = vmatpush2.msra.mxu0 0.0
    %2076 = vmatprep.subr.mxu0 0.0
    %2077 = vmatpush2.msra.mxu0 0.0
    %2078 = vmatprep.subr.mxu0 0.0
    %2079 = vmatpush2.msra.mxu0 0.0
    %2080 = vmatprep.subr.mxu0 0.0
    %2081 = vmatpush2.msra.mxu0 0.0
    %2082 = vmatprep.subr.mxu0 0.0
    %2083 = vmatpush2.msra.mxu0 0.0
    %2084 = vmatprep.subr.mxu0 0.0
    %2085 = vmatpush2.msra.mxu0 0.0
    %2086 = vmatprep.subr.mxu0 0.0
    %2087 = vmatpush2.msra.mxu0 0.0
    %2088 = vmatprep.subr.mxu0 0.0
    %2089 = vmatpush2.msra.mxu0 0.0
    %2090 = vmatprep.subr.mxu0 0.0
    %2091 = vmatpush2.msra.mxu0 0.0
    %2092 = vmatprep.subr.mxu0 0.0
    %2093 = vmatpush2.msra.mxu0 0.0
    %2094 = vmatprep.mubr.f32.mxu0 0.0
    %2095 = vmatmul.mubr.f32.gmra.mxu0 %v2028
    %v2096 = vpop.f32.mrf.mxu0
    %v2097 = vadd.f32 %v1997, %v2096
    %v2098 = vpop.f32.mrf.mxu0
    %v2099 = vadd.f32 %v1999, %v2098
    %2100 = vdwg.mxu0
    %v2101 = vld [vmem:[%s7 + $0x10] sm:$0xff]
    %v2102 = vld [vmem:[#allocation2 + $0x8] sm:$0xff]
    %v2103 = vld [vmem:[#allocation2 + $0x10] sm:$0xff]
    %v2104 = vld [vmem:[#allocation2 + $0x18] sm:$0xff]
    %v2105 = vld [vmem:[#allocation2 + $0x28] sm:$0xff]
    %v2106 = vld [vmem:[#allocation2 + $0x30] sm:$0xff]
    %v2107 = vld [vmem:[#allocation2 + $0x38] sm:$0xff]
    %2114 = vrot.lane.b32.xlu0 %v2102, 127
    %v2115 = vpop.permute.xlu0 %2114
    %2116 = vrot.lane.b32.xlu0 %v2103, 127
    %v2117 = vpop.permute.xlu0 %2116
    %2118 = vrot.lane.b32.xlu0 %v2104, 127
    %v2119 = vpop.permute.xlu0 %2118
    %2120 = vrot.lane.b32.xlu0 %v2105, 127
    %v2121 = vpop.permute.xlu0 %2120
    %2122 = vrot.lane.b32.xlu0 %v2106, 127
    %v2123 = vpop.permute.xlu0 %2122
    %2124 = vrot.lane.b32.xlu0 %v2107, 127
    %v2125 = vpop.permute.xlu0 %2124
    %v2126 = vsel %vm320, %v2115, %v2117
    %v2127 = vsel %vm320, %v2117, %v2119
    %v2128 = vsel %vm320, %v2121, %v2123
    %v2129 = vsel %vm320, %v2123, %v2125
    %v2135 = vsel %vm1926, %v2101, 0
    %2137 = vmatprep.subr.mxu0 0.0
    %2138 = vmatpush1.msra.mxu0 0.0
    %2139 = vmatprep.subr.mxu0 0.0
    %2140 = vmatpush1.msra.mxu0 0.0
    %2141 = vmatprep.subr.mxu0 0.0
    %2142 = vmatpush1.msra.mxu0 0.0
    %2143 = vmatprep.subr.mxu0 0.0
    %2144 = vmatpush1.msra.mxu0 0.0
    %2145 = vmatprep.subr.mxu0 0.0
    %2146 = vmatpush1.msra.mxu0 0.0
    %2147 = vmatprep.subr.mxu0 0.0
    %2148 = vmatpush1.msra.mxu0 0.0
    %2149 = vmatprep.subr.mxu0 0.0
    %2150 = vmatpush1.msra.mxu0 0.0
    %2151 = vmatprep.subr.mxu0 0.0
    %2152 = vmatpush1.msra.mxu0 0.0
    %2153 = vmatprep.subr.mxu0 0.0
    %2154 = vmatpush1.msra.mxu0 0.0
    %2155 = vmatprep.subr.mxu0 0.0
    %2156 = vmatpush1.msra.mxu0 0.0
    %2157 = vmatprep.subr.mxu0 0.0
    %2158 = vmatpush1.msra.mxu0 0.0
    %2159 = vmatprep.subr.mxu0 0.0
    %2160 = vmatpush1.msra.mxu0 0.0
    %2161 = vmatprep.subr.mxu0 0.0
    %2162 = vmatpush1.msra.mxu0 0.0
    %2163 = vmatprep.subr.mxu0 0.0
    %2164 = vmatpush1.msra.mxu0 0.0
    %2165 = vmatprep.subr.mxu0 %v2129
    %2166 = vmatpush1.msra.mxu0 %v2128
    %2167 = vmatprep.subr.mxu0 %v2127
    %2168 = vmatpush1.msra.mxu0 %v2126
    %2169 = vmatprep.subr.mxu0 0.0
    %2170 = vmatpush2.msra.mxu0 0.0
    %2171 = vmatprep.subr.mxu0 0.0
    %2172 = vmatpush2.msra.mxu0 0.0
    %2173 = vmatprep.subr.mxu0 0.0
    %2174 = vmatpush2.msra.mxu0 0.0
    %2175 = vmatprep.subr.mxu0 0.0
    %2176 = vmatpush2.msra.mxu0 0.0
    %2177 = vmatprep.subr.mxu0 0.0
    %2178 = vmatpush2.msra.mxu0 0.0
    %2179 = vmatprep.subr.mxu0 0.0
    %2180 = vmatpush2.msra.mxu0 0.0
    %2181 = vmatprep.subr.mxu0 0.0
    %2182 = vmatpush2.msra.mxu0 0.0
    %2183 = vmatprep.subr.mxu0 0.0
    %2184 = vmatpush2.msra.mxu0 0.0
    %2185 = vmatprep.subr.mxu0 0.0
    %2186 = vmatpush2.msra.mxu0 0.0
    %2187 = vmatprep.subr.mxu0 0.0
    %2188 = vmatpush2.msra.mxu0 0.0
    %2189 = vmatprep.subr.mxu0 0.0
    %2190 = vmatpush2.msra.mxu0 0.0
    %2191 = vmatprep.subr.mxu0 0.0
    %2192 = vmatpush2.msra.mxu0 0.0
    %2193 = vmatprep.subr.mxu0 0.0
    %2194 = vmatpush2.msra.mxu0 0.0
    %2195 = vmatprep.subr.mxu0 0.0
    %2196 = vmatpush2.msra.mxu0 0.0
    %2197 = vmatprep.subr.mxu0 0.0
    %2198 = vmatpush2.msra.mxu0 0.0
    %2199 = vmatprep.subr.mxu0 0.0
    %2200 = vmatpush2.msra.mxu0 0.0
    %2201 = vmatprep.mubr.f32.mxu0 0.0
    %2202 = vmatmul.mubr.f32.gmra.mxu0 %v2135
    %v2203 = vpop.f32.mrf.mxu0
    %v2204 = vadd.f32 0.0, %v2203
    %v2205 = vpop.f32.mrf.mxu0
    %v2206 = vadd.f32 0.0, %v2205
    %2207 = vdwg.mxu0
    %v2208 = vadd.f32 %v2097, %v2204
    %v2209 = vadd.f32 %v2099, %v2206
    %v2210 = vmul.f32 %v2208, %v438
    %v2211 = vmul.f32 %v2209, %v442
    %2212 = vmatprep.subr.mxu0 0.0
    %2213 = vmatpush1.msra.mxu0 %v54
    %2214 = vmatprep.subr.mxu0 0.0
    %2215 = vmatpush1.msra.mxu0 %v53
    %2216 = vmatprep.subr.mxu0 0.0
    %2217 = vmatpush1.msra.mxu0 %v52
    %2218 = vmatprep.subr.mxu0 0.0
    %2219 = vmatpush1.msra.mxu0 %v51
    %2220 = vmatprep.subr.mxu0 0.0
    %2221 = vmatpush1.msra.mxu0 %v50
    %2222 = vmatprep.subr.mxu0 0.0
    %2223 = vmatpush1.msra.mxu0 %v49
    %2224 = vmatprep.subr.mxu0 0.0
    %2225 = vmatpush1.msra.mxu0 %v48
    %2226 = vmatprep.subr.mxu0 0.0
    %2227 = vmatpush1.msra.mxu0 %v47
    %2228 = vmatprep.subr.mxu0 0.0
    %2229 = vmatpush1.msra.mxu0 %v46
    %2230 = vmatprep.subr.mxu0 0.0
    %2231 = vmatpush1.msra.mxu0 %v45
    %2232 = vmatprep.subr.mxu0 0.0
    %2233 = vmatpush1.msra.mxu0 %v44
    %2234 = vmatprep.subr.mxu0 0.0
    %2235 = vmatpush1.msra.mxu0 %v43
    %2236 = vmatprep.subr.mxu0 0.0
    %2237 = vmatpush1.msra.mxu0 %v42
    %2238 = vmatprep.subr.mxu0 0.0
    %2239 = vmatpush1.msra.mxu0 %v41
    %2240 = vmatprep.subr.mxu0 0.0
    %2241 = vmatpush1.msra.mxu0 %v40
    %2242 = vmatprep.subr.mxu0 0.0
    %2243 = vmatpush1.msra.mxu0 %v39
    %2244 = vmatprep.subr.mxu0 0.0
    %2245 = vmatpush2.msra.mxu0 %v70
    %2246 = vmatprep.subr.mxu0 0.0
    %2247 = vmatpush2.msra.mxu0 %v69
    %2248 = vmatprep.subr.mxu0 0.0
    %2249 = vmatpush2.msra.mxu0 %v68
    %2250 = vmatprep.subr.mxu0 0.0
    %2251 = vmatpush2.msra.mxu0 %v67
    %2252 = vmatprep.subr.mxu0 0.0
    %2253 = vmatpush2.msra.mxu0 %v66
    %2254 = vmatprep.subr.mxu0 0.0
    %2255 = vmatpush2.msra.mxu0 %v65
    %2256 = vmatprep.subr.mxu0 0.0
    %2257 = vmatpush2.msra.mxu0 %v64
    %2258 = vmatprep.subr.mxu0 0.0
    %2259 = vmatpush2.msra.mxu0 %v63
    %2260 = vmatprep.subr.mxu0 0.0
    %2261 = vmatpush2.msra.mxu0 %v62
    %2262 = vmatprep.subr.mxu0 0.0
    %2263 = vmatpush2.msra.mxu0 %v61
    %2264 = vmatprep.subr.mxu0 0.0
    %2265 = vmatpush2.msra.mxu0 %v60
    %2266 = vmatprep.subr.mxu0 0.0
    %2267 = vmatpush2.msra.mxu0 %v59
    %2268 = vmatprep.subr.mxu0 0.0
    %2269 = vmatpush2.msra.mxu0 %v58
    %2270 = vmatprep.subr.mxu0 0.0
    %2271 = vmatpush2.msra.mxu0 %v57
    %2272 = vmatprep.subr.mxu0 0.0
    %2273 = vmatpush2.msra.mxu0 %v56
    %2274 = vmatprep.subr.mxu0 0.0
    %2275 = vmatpush2.msra.mxu0 %v55
    %2276 = vmatprep.mubr.f32.mxu0 %v2211
    %2277 = vmatmul.mubr.f32.gmra.mxu0 %v2210
    %v2278 = vpop.f32.mrf.mxu0
    %v2279 = vadd.f32 0.0, %v2278
    %v2280 = vpop.f32.mrf.mxu0
    %2281 = vdwg.mxu0
    %v2282 = vsel %vm538, %v2279, 0.0
    %2283 = vadd.xlane.f32.xlu0 %v2282
    %v2284 = vpop.xlane.xlu0 %2283
    %v2285 = vmul.f32 %v2284, 0.03125
    %v2286 = vsub.f32 %v2210, %v2285
    %v2287 = vsub.f32 %v2211, %v2285
    %v2288 = vmul.f32 %v2286, %v438
    %v2289 = vmul.f32 %v2287, %v442
    %v2290 = vmul.f32 %v2288, %v2288
    %v2291 = vmul.f32 %v2289, %v2289
    %2292 = vmatprep.subr.mxu0 0.0
    %2293 = vmatpush1.msra.mxu0 %v54
    %2294 = vmatprep.subr.mxu0 0.0
    %2295 = vmatpush1.msra.mxu0 %v53
    %2296 = vmatprep.subr.mxu0 0.0
    %2297 = vmatpush1.msra.mxu0 %v52
    %2298 = vmatprep.subr.mxu0 0.0
    %2299 = vmatpush1.msra.mxu0 %v51
    %2300 = vmatprep.subr.mxu0 0.0
    %2301 = vmatpush1.msra.mxu0 %v50
    %2302 = vmatprep.subr.mxu0 0.0
    %2303 = vmatpush1.msra.mxu0 %v49
    %2304 = vmatprep.subr.mxu0 0.0
    %2305 = vmatpush1.msra.mxu0 %v48
    %2306 = vmatprep.subr.mxu0 0.0
    %2307 = vmatpush1.msra.mxu0 %v47
    %2308 = vmatprep.subr.mxu0 0.0
    %2309 = vmatpush1.msra.mxu0 %v46
    %2310 = vmatprep.subr.mxu0 0.0
    %2311 = vmatpush1.msra.mxu0 %v45
    %2312 = vmatprep.subr.mxu0 0.0
    %2313 = vmatpush1.msra.mxu0 %v44
    %2314 = vmatprep.subr.mxu0 0.0
    %2315 = vmatpush1.msra.mxu0 %v43
    %2316 = vmatprep.subr.mxu0 0.0
    %2317 = vmatpush1.msra.mxu0 %v42
    %2318 = vmatprep.subr.mxu0 0.0
    %2319 = vmatpush1.msra.mxu0 %v41
    %2320 = vmatprep.subr.mxu0 0.0
    %2321 = vmatpush1.msra.mxu0 %v40
    %2322 = vmatprep.subr.mxu0 0.0
    %2323 = vmatpush1.msra.mxu0 %v39
    %2324 = vmatprep.subr.mxu0 0.0
    %2325 = vmatpush2.msra.mxu0 %v70
    %2326 = vmatprep.subr.mxu0 0.0
    %2327 = vmatpush2.msra.mxu0 %v69
    %2328 = vmatprep.subr.mxu0 0.0
    %2329 = vmatpush2.msra.mxu0 %v68
    %2330 = vmatprep.subr.mxu0 0.0
    %2331 = vmatpush2.msra.mxu0 %v67
    %2332 = vmatprep.subr.mxu0 0.0
    %2333 = vmatpush2.msra.mxu0 %v66
    %2334 = vmatprep.subr.mxu0 0.0
    %2335 = vmatpush2.msra.mxu0 %v65
    %2336 = vmatprep.subr.mxu0 0.0
    %2337 = vmatpush2.msra.mxu0 %v64
    %2338 = vmatprep.subr.mxu0 0.0
    %2339 = vmatpush2.msra.mxu0 %v63
    %2340 = vmatprep.subr.mxu0 0.0
    %2341 = vmatpush2.msra.mxu0 %v62
    %2342 = vmatprep.subr.mxu0 0.0
    %2343 = vmatpush2.msra.mxu0 %v61
    %2344 = vmatprep.subr.mxu0 0.0
    %2345 = vmatpush2.msra.mxu0 %v60
    %2346 = vmatprep.subr.mxu0 0.0
    %2347 = vmatpush2.msra.mxu0 %v59
    %2348 = vmatprep.subr.mxu0 0.0
    %2349 = vmatpush2.msra.mxu0 %v58
    %2350 = vmatprep.subr.mxu0 0.0
    %2351 = vmatpush2.msra.mxu0 %v57
    %2352 = vmatprep.subr.mxu0 0.0
    %2353 = vmatpush2.msra.mxu0 %v56
    %2354 = vmatprep.subr.mxu0 0.0
    %2355 = vmatpush2.msra.mxu0 %v55
    %2356 = vmatprep.mubr.f32.mxu0 %v2291
    %2357 = vmatmul.mubr.f32.gmra.mxu0 %v2290
    %v2358 = vpop.f32.mrf.mxu0
    %v2359 = vadd.f32 0.0, %v2358
    %v2360 = vpop.f32.mrf.mxu0
    %2361 = vdwg.mxu0
    %v2362 = vsel %vm538, %v2359, 0.0
    %2363 = vadd.xlane.f32.xlu0 %v2362
    %v2364 = vpop.xlane.xlu0 %2363
    %v2365 = vmul.f32 %v2364, 0.03125
    %v2366 = vadd.f32 %v2365, 1e-05
    %v2367 = vrsqrt.pop %v2366
    %v2368 = vmul.f32 %v72, %v2367
    %2370 = vset.pattern.permute.xlu0 4
    %2371 = vperm.xlu0 %2370, %v2368
    %v2372 = vpop.permute.xlu0 %2371
    %v2374 = vmul.f32 %v2288, %v2372
    %v2375 = vmul.f32 %v2289, %v2372
    %2376 = vset.pattern.permute.xlu0 5
    %2377 = vperm.xlu0 %2376, %v72
    %v2378 = vpop.permute.xlu0 %2377
    %v2380 = vadd.f32 %v2374, %v2378
    %v2381 = vadd.f32 %v2375, %v2378
    %vm2382 = vcmp.gt.f32.partialorder %v2380, 20.0
    %vm2383 = vcmp.gt.f32.partialorder %v2381, 20.0
    %v2384 = vmul.f32 %v2380, 1.442695
    %v2385 = vpow.pop %v2384
    %v2386 = vmul.f32 %v2381, 1.442695
    %v2387 = vpow.pop %v2386
    %v2388 = vadd.f32 %v2385, 1.0
    %v2389 = vlog2.pop %v2388
    %v2390 = vmul.f32 %v2389, 0.6931472
    %v2391 = vmul.f32 -0.5, %v2385
    %v2392 = vadd.f32 %v2391, 1.0
    %v2393 = vmul.f32 %v2392, %v2385
    %v2394 = vand.u32 2147483647, %v2385
    %vm2395 = vcmp.lt.f32.partialorder %v2394, 0.0004427343
    %v2396 = vsel %vm2395, %v2393, %v2390
    %v2397 = vadd.f32 %v2387, 1.0
    %v2398 = vlog2.pop %v2397
    %v2399 = vmul.f32 %v2398, 0.6931472
    %v2400 = vmul.f32 -0.5, %v2387
    %v2401 = vadd.f32 %v2400, 1.0
    %v2402 = vmul.f32 %v2401, %v2387
    %v2403 = vand.u32 2147483647, %v2387
    %vm2404 = vcmp.lt.f32.partialorder %v2403, 0.0004427343
    %v2405 = vsel %vm2404, %v2402, %v2399
    %v2406 = vsel %vm2382, %v2380, %v2396
    %v2407 = vsel %vm2383, %v2381, %v2405
    %v2408 = vmul.f32 %v2406, %v438
    %v2409 = vmul.f32 %v2407, %v442
    %2410 = vmatprep.subr.mxu0 0.0
    %2411 = vmatpush1.msra.mxu0 %v54
    %2412 = vmatprep.subr.mxu0 0.0
    %2413 = vmatpush1.msra.mxu0 %v53
    %2414 = vmatprep.subr.mxu0 0.0
    %2415 = vmatpush1.msra.mxu0 %v52
    %2416 = vmatprep.subr.mxu0 0.0
    %2417 = vmatpush1.msra.mxu0 %v51
    %2418 = vmatprep.subr.mxu0 0.0
    %2419 = vmatpush1.msra.mxu0 %v50
    %2420 = vmatprep.subr.mxu0 0.0
    %2421 = vmatpush1.msra.mxu0 %v49
    %2422 = vmatprep.subr.mxu0 0.0
    %2423 = vmatpush1.msra.mxu0 %v48
    %2424 = vmatprep.subr.mxu0 0.0
    %2425 = vmatpush1.msra.mxu0 %v47
    %2426 = vmatprep.subr.mxu0 0.0
    %2427 = vmatpush1.msra.mxu0 %v46
    %2428 = vmatprep.subr.mxu0 0.0
    %2429 = vmatpush1.msra.mxu0 %v45
    %2430 = vmatprep.subr.mxu0 0.0
    %2431 = vmatpush1.msra.mxu0 %v44
    %2432 = vmatprep.subr.mxu0 0.0
    %2433 = vmatpush1.msra.mxu0 %v43
    %2434 = vmatprep.subr.mxu0 0.0
    %2435 = vmatpush1.msra.mxu0 %v42
    %2436 = vmatprep.subr.mxu0 0.0
    %2437 = vmatpush1.msra.mxu0 %v41
    %2438 = vmatprep.subr.mxu0 0.0
    %2439 = vmatpush1.msra.mxu0 %v40
    %2440 = vmatprep.subr.mxu0 0.0
    %2441 = vmatpush1.msra.mxu0 %v39
    %2442 = vmatprep.subr.mxu0 0.0
    %2443 = vmatpush2.msra.mxu0 %v70
    %2444 = vmatprep.subr.mxu0 0.0
    %2445 = vmatpush2.msra.mxu0 %v69
    %2446 = vmatprep.subr.mxu0 0.0
    %2447 = vmatpush2.msra.mxu0 %v68
    %2448 = vmatprep.subr.mxu0 0.0
    %2449 = vmatpush2.msra.mxu0 %v67
    %2450 = vmatprep.subr.mxu0 0.0
    %2451 = vmatpush2.msra.mxu0 %v66
    %2452 = vmatprep.subr.mxu0 0.0
    %2453 = vmatpush2.msra.mxu0 %v65
    %2454 = vmatprep.subr.mxu0 0.0
    %2455 = vmatpush2.msra.mxu0 %v64
    %2456 = vmatprep.subr.mxu0 0.0
    %2457 = vmatpush2.msra.mxu0 %v63
    %2458 = vmatprep.subr.mxu0 0.0
    %2459 = vmatpush2.msra.mxu0 %v62
    %2460 = vmatprep.subr.mxu0 0.0
    %2461 = vmatpush2.msra.mxu0 %v61
    %2462 = vmatprep.subr.mxu0 0.0
    %2463 = vmatpush2.msra.mxu0 %v60
    %2464 = vmatprep.subr.mxu0 0.0
    %2465 = vmatpush2.msra.mxu0 %v59
    %2466 = vmatprep.subr.mxu0 0.0
    %2467 = vmatpush2.msra.mxu0 %v58
    %2468 = vmatprep.subr.mxu0 0.0
    %2469 = vmatpush2.msra.mxu0 %v57
    %2470 = vmatprep.subr.mxu0 0.0
    %2471 = vmatpush2.msra.mxu0 %v56
    %2472 = vmatprep.subr.mxu0 0.0
    %2473 = vmatpush2.msra.mxu0 %v55
    %2474 = vmatprep.mubr.f32.mxu0 %v2409
    %2475 = vmatmul.mubr.f32.gmra.mxu0 %v2408
    %v2476 = vpop.f32.mrf.mxu0
    %v2477 = vadd.f32 0.0, %v2476
    %v2478 = vpop.f32.mrf.mxu0
    %2479 = vdwg.mxu0
    %v2480 = vmul.f32 %v2477, 0.0625
    %v2482 = vsel %vm538, %v2480, 0
    %2484 = vmatprep.subr.mxu0 0.0
    %2485 = vmatpush1.msra.mxu0 0.0
    %2486 = vmatprep.subr.mxu0 0.0
    %2487 = vmatpush1.msra.mxu0 0.0
    %2488 = vmatprep.subr.mxu0 0.0
    %2489 = vmatpush1.msra.mxu0 0.0
    %2490 = vmatprep.subr.mxu0 0.0
    %2491 = vmatpush1.msra.mxu0 0.0
    %2492 = vmatprep.subr.mxu0 0.0
    %2493 = vmatpush1.msra.mxu0 0.0
    %2494 = vmatprep.subr.mxu0 0.0
    %2495 = vmatpush1.msra.mxu0 0.0
    %2496 = vmatprep.subr.mxu0 0.0
    %2497 = vmatpush1.msra.mxu0 0.0
    %2498 = vmatprep.subr.mxu0 0.0
    %2499 = vmatpush1.msra.mxu0 0.0
    %2500 = vmatprep.subr.mxu0 0.0
    %2501 = vmatpush1.msra.mxu0 0.0
    %2502 = vmatprep.subr.mxu0 0.0
    %2503 = vmatpush1.msra.mxu0 0.0
    %2504 = vmatprep.subr.mxu0 0.0
    %2505 = vmatpush1.msra.mxu0 0.0
    %2506 = vmatprep.subr.mxu0 0.0
    %2507 = vmatpush1.msra.mxu0 0.0
    %2508 = vmatprep.subr.mxu0 0.0
    %2509 = vmatpush1.msra.mxu0 0.0
    %2510 = vmatprep.subr.mxu0 0.0
    %2511 = vmatpush1.msra.mxu0 0.0
    %2512 = vmatprep.subr.mxu0 0.0
    %2513 = vmatpush1.msra.mxu0 0.0
    %2514 = vmatprep.subr.mxu0 %v973
    %2515 = vmatpush1.msra.mxu0 %v971
    %2516 = vmatprep.subr.mxu0 0.0
    %2517 = vmatpush2.msra.mxu0 0.0
    %2518 = vmatprep.subr.mxu0 0.0
    %2519 = vmatpush2.msra.mxu0 0.0
    %2520 = vmatprep.subr.mxu0 0.0
    %2521 = vmatpush2.msra.mxu0 0.0
    %2522 = vmatprep.subr.mxu0 0.0
    %2523 = vmatpush2.msra.mxu0 0.0
    %2524 = vmatprep.subr.mxu0 0.0
    %2525 = vmatpush2.msra.mxu0 0.0
    %2526 = vmatprep.subr.mxu0 0.0
    %2527 = vmatpush2.msra.mxu0 0.0
    %2528 = vmatprep.subr.mxu0 0.0
    %2529 = vmatpush2.msra.mxu0 0.0
    %2530 = vmatprep.subr.mxu0 0.0
    %2531 = vmatpush2.msra.mxu0 0.0
    %2532 = vmatprep.subr.mxu0 0.0
    %2533 = vmatpush2.msra.mxu0 0.0
    %2534 = vmatprep.subr.mxu0 0.0
    %2535 = vmatpush2.msra.mxu0 0.0
    %2536 = vmatprep.subr.mxu0 0.0
    %2537 = vmatpush2.msra.mxu0 0.0
    %2538 = vmatprep.subr.mxu0 0.0
    %2539 = vmatpush2.msra.mxu0 0.0
    %2540 = vmatprep.subr.mxu0 0.0
    %2541 = vmatpush2.msra.mxu0 0.0
    %2542 = vmatprep.subr.mxu0 0.0
    %2543 = vmatpush2.msra.mxu0 0.0
    %2544 = vmatprep.subr.mxu0 0.0
    %2545 = vmatpush2.msra.mxu0 0.0
    %2546 = vmatprep.subr.mxu0 0.0
    %2547 = vmatpush2.msra.mxu0 0.0
    %2548 = vmatprep.mubr.f32.mxu0 0.0
    %2549 = vmatmul.mubr.f32.gmra.mxu0 %v2482
    %v2550 = vpop.f32.mrf.mxu0
    %v2551 = vadd.f32 1e-08, %v2550
    %v2552 = vpop.f32.mrf.mxu0
    %v2553 = vadd.f32 1e-08, %v2552
    %2554 = vdwg.mxu0
    %v2555 = vrcp.pop %v2551
    %v2556 = vrcp.pop %v2553
    %v2557 = vmul.f32 %v2408, %v2555
    %v2558 = vmul.f32 %v2409, %v2556
    %2559 = vmatprep.subr.mxu0 0.0
    %2560 = vmatpush1.msra.mxu0 %v54
    %2561 = vmatprep.subr.mxu0 0.0
    %2562 = vmatpush1.msra.mxu0 %v53
    %2563 = vmatprep.subr.mxu0 0.0
    %2564 = vmatpush1.msra.mxu0 %v52
    %2565 = vmatprep.subr.mxu0 0.0
    %2566 = vmatpush1.msra.mxu0 %v51
    %2567 = vmatprep.subr.mxu0 0.0
    %2568 = vmatpush1.msra.mxu0 %v50
    %2569 = vmatprep.subr.mxu0 0.0
    %2570 = vmatpush1.msra.mxu0 %v49
    %2571 = vmatprep.subr.mxu0 0.0
    %2572 = vmatpush1.msra.mxu0 %v48
    %2573 = vmatprep.subr.mxu0 0.0
    %2574 = vmatpush1.msra.mxu0 %v47
    %2575 = vmatprep.subr.mxu0 0.0
    %2576 = vmatpush1.msra.mxu0 %v46
    %2577 = vmatprep.subr.mxu0 0.0
    %2578 = vmatpush1.msra.mxu0 %v45
    %2579 = vmatprep.subr.mxu0 0.0
    %2580 = vmatpush1.msra.mxu0 %v44
    %2581 = vmatprep.subr.mxu0 0.0
    %2582 = vmatpush1.msra.mxu0 %v43
    %2583 = vmatprep.subr.mxu0 0.0
    %2584 = vmatpush1.msra.mxu0 %v42
    %2585 = vmatprep.subr.mxu0 0.0
    %2586 = vmatpush1.msra.mxu0 %v41
    %2587 = vmatprep.subr.mxu0 0.0
    %2588 = vmatpush1.msra.mxu0 %v40
    %2589 = vmatprep.subr.mxu0 0.0
    %2590 = vmatpush1.msra.mxu0 %v39
    %2591 = vmatprep.subr.mxu0 0.0
    %2592 = vmatpush2.msra.mxu0 %v70
    %2593 = vmatprep.subr.mxu0 0.0
    %2594 = vmatpush2.msra.mxu0 %v69
    %2595 = vmatprep.subr.mxu0 0.0
    %2596 = vmatpush2.msra.mxu0 %v68
    %2597 = vmatprep.subr.mxu0 0.0
    %2598 = vmatpush2.msra.mxu0 %v67
    %2599 = vmatprep.subr.mxu0 0.0
    %2600 = vmatpush2.msra.mxu0 %v66
    %2601 = vmatprep.subr.mxu0 0.0
    %2602 = vmatpush2.msra.mxu0 %v65
    %2603 = vmatprep.subr.mxu0 0.0
    %2604 = vmatpush2.msra.mxu0 %v64
    %2605 = vmatprep.subr.mxu0 0.0
    %2606 = vmatpush2.msra.mxu0 %v63
    %2607 = vmatprep.subr.mxu0 0.0
    %2608 = vmatpush2.msra.mxu0 %v62
    %2609 = vmatprep.subr.mxu0 0.0
    %2610 = vmatpush2.msra.mxu0 %v61
    %2611 = vmatprep.subr.mxu0 0.0
    %2612 = vmatpush2.msra.mxu0 %v60
    %2613 = vmatprep.subr.mxu0 0.0
    %2614 = vmatpush2.msra.mxu0 %v59
    %2615 = vmatprep.subr.mxu0 0.0
    %2616 = vmatpush2.msra.mxu0 %v58
    %2617 = vmatprep.subr.mxu0 0.0
    %2618 = vmatpush2.msra.mxu0 %v57
    %2619 = vmatprep.subr.mxu0 0.0
    %2620 = vmatpush2.msra.mxu0 %v56
    %2621 = vmatprep.subr.mxu0 0.0
    %2622 = vmatpush2.msra.mxu0 %v55
    %2623 = vmatprep.mubr.f32.mxu0 %v2558
    %2624 = vmatmul.mubr.f32.gmra.mxu0 %v2557
    %v2625 = vpop.f32.mrf.mxu0
    %v2626 = vadd.f32 0.0, %v2625
    %v2627 = vpop.f32.mrf.mxu0
    %2628 = vdwg.mxu0
    %v2629 = vmul.f32 %v2626, 0.0625
    %v2631 = vsel %vm538, %v2629, 0
    %2633 = vmatprep.subr.mxu0 0.0
    %2634 = vmatpush1.msra.mxu0 0.0
    %2635 = vmatprep.subr.mxu0 0.0
    %2636 = vmatpush1.msra.mxu0 0.0
    %2637 = vmatprep.subr.mxu0 0.0
    %2638 = vmatpush1.msra.mxu0 0.0
    %2639 = vmatprep.subr.mxu0 0.0
    %2640 = vmatpush1.msra.mxu0 0.0
    %2641 = vmatprep.subr.mxu0 0.0
    %2642 = vmatpush1.msra.mxu0 0.0
    %2643 = vmatprep.subr.mxu0 0.0
    %2644 = vmatpush1.msra.mxu0 0.0
    %2645 = vmatprep.subr.mxu0 0.0
    %2646 = vmatpush1.msra.mxu0 0.0
    %2647 = vmatprep.subr.mxu0 0.0
    %2648 = vmatpush1.msra.mxu0 0.0
    %2649 = vmatprep.subr.mxu0 0.0
    %2650 = vmatpush1.msra.mxu0 0.0
    %2651 = vmatprep.subr.mxu0 0.0
    %2652 = vmatpush1.msra.mxu0 0.0
    %2653 = vmatprep.subr.mxu0 0.0
    %2654 = vmatpush1.msra.mxu0 0.0
    %2655 = vmatprep.subr.mxu0 0.0
    %2656 = vmatpush1.msra.mxu0 0.0
    %2657 = vmatprep.subr.mxu0 0.0
    %2658 = vmatpush1.msra.mxu0 0.0
    %2659 = vmatprep.subr.mxu0 0.0
    %2660 = vmatpush1.msra.mxu0 0.0
    %2661 = vmatprep.subr.mxu0 0.0
    %2662 = vmatpush1.msra.mxu0 0.0
    %2663 = vmatprep.subr.mxu0 %v973
    %2664 = vmatpush1.msra.mxu0 %v971
    %2665 = vmatprep.subr.mxu0 0.0
    %2666 = vmatpush2.msra.mxu0 0.0
    %2667 = vmatprep.subr.mxu0 0.0
    %2668 = vmatpush2.msra.mxu0 0.0
    %2669 = vmatprep.subr.mxu0 0.0
    %2670 = vmatpush2.msra.mxu0 0.0
    %2671 = vmatprep.subr.mxu0 0.0
    %2672 = vmatpush2.msra.mxu0 0.0
    %2673 = vmatprep.subr.mxu0 0.0
    %2674 = vmatpush2.msra.mxu0 0.0
    %2675 = vmatprep.subr.mxu0 0.0
    %2676 = vmatpush2.msra.mxu0 0.0
    %2677 = vmatprep.subr.mxu0 0.0
    %2678 = vmatpush2.msra.mxu0 0.0
    %2679 = vmatprep.subr.mxu0 0.0
    %2680 = vmatpush2.msra.mxu0 0.0
    %2681 = vmatprep.subr.mxu0 0.0
    %2682 = vmatpush2.msra.mxu0 0.0
    %2683 = vmatprep.subr.mxu0 0.0
    %2684 = vmatpush2.msra.mxu0 0.0
    %2685 = vmatprep.subr.mxu0 0.0
    %2686 = vmatpush2.msra.mxu0 0.0
    %2687 = vmatprep.subr.mxu0 0.0
    %2688 = vmatpush2.msra.mxu0 0.0
    %2689 = vmatprep.subr.mxu0 0.0
    %2690 = vmatpush2.msra.mxu0 0.0
    %2691 = vmatprep.subr.mxu0 0.0
    %2692 = vmatpush2.msra.mxu0 0.0
    %2693 = vmatprep.subr.mxu0 0.0
    %2694 = vmatpush2.msra.mxu0 0.0
    %2695 = vmatprep.subr.mxu0 0.0
    %2696 = vmatpush2.msra.mxu0 0.0
    %2697 = vmatprep.mubr.f32.mxu0 0.0
    %2698 = vmatmul.mubr.f32.gmra.mxu0 %v2631
    %v2699 = vpop.f32.mrf.mxu0
    %v2700 = vadd.f32 1e-08, %v2699
    %v2701 = vpop.f32.mrf.mxu0
    %v2702 = vadd.f32 1e-08, %v2701
    %2703 = vdwg.mxu0
    %v2704 = vrcp.pop %v2700
    %v2705 = vrcp.pop %v2702
    %v2706 = vmul.f32 %v2557, %v2704
    %v2707 = vmul.f32 %v2558, %v2705
    %2708 = vst [vmem:[#allocation3] sm:$0xff] %v2706
    %2709 = vst [vmem:[#allocation3 + $0x8] sm:$0xff] %v2707
    // Predicated region
    $region34: #{tpu_custom_call.1} parent=1 // pred_check
      _
    $region35: #{tpu_custom_call.1} parent=1 // pred_check_branch
      %2711 = sbr.rel (0) target = $region37
    $region36: #{tpu_custom_call.1} parent=1 // pred_region
      %s2713 = ssub.s32 256, 256
      %2714 = vsyncadd [#allocation4], %s2713
      %s2716 = sshll.u32 [#allocation3], 4
      %s2717 = int_to_ptr.vmem [resolvable:$true] %s2716
      %2719 = dma.vmem_to_hbm [thread:$0]  %s2717, 256, %s8, [#allocation4]
    $region37: #{tpu_custom_call.1} parent=1 // pred_fallthru
      _
    // Predicated region
    $region38: #{tpu_custom_call.1} parent=1 // pred_check
      _
    $region39: #{tpu_custom_call.1} parent=1 // pred_check_branch
      %2721 = sbr.rel (0) target = $region41
    $region40: #{tpu_custom_call.1} parent=1 // pred_region
      %2722 = dma.done [#allocation4], 256
    $region41: #{tpu_custom_call.1} parent=1 // pred_fallthru
      _
    %2723 = vsyncpa [#allocation4], 1

</llo_original>
